<compile_context>
chip_gen: v5e
topology: v5e:2x2
jax: 0.10.0
libtpu: 0.0.40
codegen_flags: <defaults>
</compile_context>

<pallas_src>
import functools

import jax
import jax.numpy as jnp
from jax import lax
from jax.experimental import pallas as pl
from jax.experimental.pallas import tpu as pltpu


# ----------------------------------------------------------------------------
# Kernel: TB images per grid step, everything stays in vregs/VMEM.
# ----------------------------------------------------------------------------
def _block_kernel(x_ref, mcs_ref, mud1_ref, b1_ref, mc2_ref, mud2_ref,
                  b2_ref, bs_ref, pc_ref, qf_ref, out_ref, *, H):
    f32, bf16 = jnp.float32, jnp.bfloat16
    x = x_ref[...]                                  # (M, W*Cin) f32, M = TB*H
    M = x.shape[0]
    WCo = b1_ref.shape[1]                           # W*Cout
    Mo2, two_woco = out_ref.shape                   # (TB*Ho/2, 2*Wo*Cout)
    WoCo = two_woco // 2

    # Per-image boundary masks (zero padding rows for the ky = 0 / 2 taps).
    row = lax.broadcasted_iota(jnp.int32, (M, 1), 0)
    top = (row % H) == 0
    bot = (row % H) == (H - 1)

    def shift_up(a):   # a[i-1], zeroed at each image's first row (pad row)
        return jnp.where(top, 0.0, pltpu.roll(a, shift=1, axis=0))

    def shift_dn(a):   # a[i+1], zeroed at each image's last row (pad row)
        return jnp.where(bot, 0.0, pltpu.roll(a, shift=a.shape[0] - 1, axis=0))

    # --- conv1 (3x3, pad=1) + folded BN1; center tap fused with the 1x1
    #     scaler (shared LHS, 2*WCo output lanes).  bf16 operands, f32 accum.
    cs = jnp.dot(x.astype(bf16), mcs_ref[...], preferred_element_type=f32)
    u1 = jnp.dot(shift_up(x).astype(bf16), mud1_ref[0], preferred_element_type=f32)
    d1 = jnp.dot(shift_dn(x).astype(bf16), mud1_ref[1], preferred_element_type=f32)
    h1 = jnp.maximum(cs[:, :WCo] + u1 + d1 + b1_ref[...], 0.0)   # + ReLU
    scaled = cs[:, WCo:] + bs_ref[...]                           # scaler branch

    # --- conv2 (3x3, pad=1) + folded BN2 (Dropout2d = identity in eval mode)
    c2 = jnp.dot(h1.astype(bf16), mc2_ref[...], preferred_element_type=f32)
    u2 = jnp.dot(shift_up(h1).astype(bf16), mud2_ref[0], preferred_element_type=f32)
    d2 = jnp.dot(shift_dn(h1).astype(bf16), mud2_ref[1], preferred_element_type=f32)
    h2 = c2 + u2 + d2 + b2_ref[...]

    # --- residual add + activation2 (ReLU), then MaxPool2d(2,2) --------------
    y = jnp.maximum(scaled + h2, 0.0)                            # (M, WCo) f32
    # Row-pair max; only even rows are ever selected below, so no mask needed.
    rowmax = jnp.maximum(y, pltpu.roll(y, shift=M - 1, axis=0))
    # Row selection (and output-row pairing) + fused even/odd column candidates.
    phc = jnp.dot(pc_ref[...], rowmax, preferred_element_type=f32)   # (2*Mo2, WCo)
    cc = jnp.dot(phc, qf_ref[...], preferred_element_type=f32)       # (2*Mo2, 2*WoCo)
    mm = jnp.maximum(cc, pltpu.roll(cc, shift=WoCo, axis=1))         # column-pair max
    # Lane-dense store: row r packs pooled rows 2r (left 64 lanes) and 2r+1.
    lane = lax.broadcasted_iota(jnp.int32, (Mo2, two_woco), 1)
    out_ref[...] = jnp.where(lane < WoCo, mm[:Mo2], mm[Mo2:]).astype(out_ref.dtype)


# ----------------------------------------------------------------------------
# Wrapper-side constant-matrix builders (layout plumbing only).
# ----------------------------------------------------------------------------
def _build_band(wf, W):
    """wf: (3, 3, Ci, Co) folded conv weights -> (3, W*Ci, W*Co) band matrices.

    M[ky][(j', ci), (j, co)] = wf[ky, j'-j+1, ci, co] for |j'-j| <= 1, else 0.
    The band structure encodes the zero padding along W exactly.
    """
    _, _, Ci, Co = wf.shape
    jp = jnp.arange(W)
    j = jnp.arange(W)
    kx = jp[:, None] - j[None, :] + 1                    # (W, W)
    valid = ((kx >= 0) & (kx <= 2)).astype(jnp.float32)
    kxc = jnp.clip(kx, 0, 2)
    band = wf[:, kxc] * valid[None, :, :, None, None]    # (3, W, W, Ci, Co)
    band = jnp.transpose(band, (0, 1, 3, 2, 4)).reshape(3, W * Ci, W * Co)
    return band


def _build_pointwise(ws, W):
    """ws: (Ci, Co) 1x1 conv weights -> block-diagonal (W*Ci, W*Co)."""
    Ci, Co = ws.shape
    eye = jnp.eye(W, dtype=jnp.float32)
    return jnp.einsum('ab,cd->acbd', eye, ws).reshape(W * Ci, W * Co)


def _build_colpool_fused(W, C):
    """Fused even/odd column-pool selection: (W*C, 2*Wo*C)."""
    Wo = W // 2
    j = jnp.arange(W)
    cm = jnp.eye(C, dtype=jnp.float32)
    mats = []
    for k in range(2):
        jm = (j[:, None] == (2 * jnp.arange(Wo) + k)[None, :]).astype(jnp.float32)
        mats.append(jnp.einsum('ab,cd->acbd', jm, cm).reshape(W * C, Wo * C))
    return jnp.concatenate(mats, axis=-1)                # (W*C, 2*Wo*C)


def _build_rowpool_pair_mat(tb, H):
    """Selects rowmax rows 4r (first half) and 4r+2 (second half): (TB*H/2, TB*H)."""
    M = tb * H
    Mo2 = M // 4
    r = jnp.arange(Mo2)
    p0 = jax.nn.one_hot(4 * r, M, dtype=jnp.float32)     # -> pooled rows 2r
    p1 = jax.nn.one_hot(4 * r + 2, M, dtype=jnp.float32) # -> pooled rows 2r+1
    return jnp.concatenate([p0, p1], axis=0)             # (2*Mo2, M)


# ----------------------------------------------------------------------------
# Public wrapper (NCHW in / NCHW out, like the PyTorch module).
# ----------------------------------------------------------------------------
@functools.partial(jax.jit, static_argnames=("tb",))
def block_forward_pallas(x_nchw, w1f, b1, w2f, b2, ws, bs, *, tb=8):
    N, Cin, H, W = x_nchw.shape
    Cout = w1f.shape[-1]
    assert H % 4 == 0 and W % 2 == 0, "needs H%4==0, W%2==0 (pool + row pairing)"
    Ho, Wo = H // 2, W // 2

    # Pad the batch up to a multiple of tb with zero images (dropped at the end;
    # boundary masks keep them from affecting real images).
    n_pad = (-N) % tb
    if n_pad:
        x_nchw = jnp.concatenate(
            [x_nchw, jnp.zeros((n_pad,) + x_nchw.shape[1:], x_nchw.dtype)], axis=0)
    Np = N + n_pad

    # NCHW -> batched (Np*H, W*Cin) slab; lanes hold (width, channel).
    x = jnp.transpose(x_nchw, (0, 2, 3, 1)).astype(jnp.float32)
    x_slab = x.reshape(Np * H, W * Cin)

    bf16 = jnp.bfloat16
    M1 = _build_band(w1f, W)                              # (3, W*Cin,  W*Cout)
    M2 = _build_band(w2f, W)                              # (3, W*Cout, W*Cout)
    Ms = _build_pointwise(ws, W)                          # (W*Cin, W*Cout)
    Mcs = jnp.concatenate([M1[1], Ms], axis=-1).astype(bf16)   # (W*Cin, 2*W*Cout)
    Mud1 = jnp.stack([M1[0], M1[2]]).astype(bf16)              # (2, W*Cin,  W*Cout)
    Mc2 = M2[1].astype(bf16)                                   # (W*Cout, W*Cout)
    Mud2 = jnp.stack([M2[0], M2[2]]).astype(bf16)              # (2, W*Cout, W*Cout)
    PC = _build_rowpool_pair_mat(tb, H)                        # (tb*H/2, tb*H) f32
    QF = _build_colpool_fused(W, Cout)                         # (W*Cout, 2*Wo*Cout) f32
    b1t = jnp.tile(b1, W)[None, :].astype(jnp.float32)         # (1, W*Cout)
    b2t = jnp.tile(b2, W)[None, :].astype(jnp.float32)
    bst = jnp.tile(bs, W)[None, :].astype(jnp.float32)

    MB = tb * H                                            # rows per grid step
    Mo2 = tb * Ho // 2                                     # paired output rows / step
    grid = (Np // tb,)

    out = pl.pallas_call(
        functools.partial(_block_kernel, H=H),
        out_shape=jax.ShapeDtypeStruct((Np * Ho // 2, 2 * Wo * Cout), jnp.float32),
        grid=grid,
        in_specs=[
            pl.BlockSpec((MB, W * Cin), lambda n: (n, 0)),             # activations
            pl.BlockSpec((W * Cin, 2 * W * Cout), lambda n: (0, 0)),   # center+scaler
            pl.BlockSpec((2, W * Cin, W * Cout), lambda n: (0, 0, 0)), # conv1 ky=0/2
            pl.BlockSpec((1, W * Cout), lambda n: (0, 0)),             # bias1
            pl.BlockSpec((W * Cout, W * Cout), lambda n: (0, 0)),      # conv2 center
            pl.BlockSpec((2, W * Cout, W * Cout), lambda n: (0, 0, 0)),# conv2 ky=0/2
            pl.BlockSpec((1, W * Cout), lambda n: (0, 0)),             # bias2
            pl.BlockSpec((1, W * Cout), lambda n: (0, 0)),             # scaler bias
            pl.BlockSpec((2 * Mo2, MB), lambda n: (0, 0)),             # row-pool/pair
            pl.BlockSpec((W * Cout, 2 * Wo * Cout), lambda n: (0, 0)), # col-pool fused
        ],
        out_specs=pl.BlockSpec((Mo2, 2 * Wo * Cout), lambda n: (n, 0)),
        compiler_params=pltpu.CompilerParams(
            dimension_semantics=("parallel",)),
    )(x_slab, Mcs, Mud1, b1t, Mc2, Mud2, b2t, bst, PC, QF)

    # (Np*Ho/2, 2*Wo*Cout) -> (Np, Ho, Wo, Cout): pure reshape (rows were packed
    # in pairs along lanes, in ho order), then drop padding and go back to NCHW.
    out = out.reshape(Np, Ho, Wo, Cout)[:N]
    return jnp.transpose(out, (0, 3, 1, 2))


# ----------------------------------------------------------------------------
# Parameter construction (BN folded, eval mode) + pure-JAX reference.
# ----------------------------------------------------------------------------
def _fold_conv_bn(w_oihw, bias, gamma, beta, rmean, rvar, eps=1e-5):
    """Fold Conv2d bias + eval-mode BatchNorm2d into (kh, kw, ci, co), (co,)."""
    scale = gamma / jnp.sqrt(rvar + eps)
    w = jnp.transpose(w_oihw, (2, 3, 1, 0)) * scale
    b = scale * (bias - rmean) + beta
    return w.astype(jnp.float32), b.astype(jnp.float32)


def make_block_params(key, in_chan, out_chan, eps=1e-5):
    """Deterministic synthetic parameters, shapes per Block.__init__, BN folded."""
    ks = jax.random.split(key, 20)
    w1 = 0.1 * jax.random.normal(ks[0], (out_chan, in_chan, 3, 3), jnp.float32)
    b1 = 0.1 * jax.random.normal(ks[1], (out_chan,), jnp.float32)
    g1 = 1.0 + 0.1 * jax.random.normal(ks[2], (out_chan,), jnp.float32)
    be1 = 0.1 * jax.random.normal(ks[3], (out_chan,), jnp.float32)
    rm1 = 0.1 * jax.random.normal(ks[4], (out_chan,), jnp.float32)
    rv1 = 1.0 + 0.5 * jax.random.uniform(ks[5], (out_chan,), jnp.float32)
    w2 = 0.1 * jax.random.normal(ks[6], (out_chan, out_chan, 3, 3), jnp.float32)
    b2 = 0.1 * jax.random.normal(ks[7], (out_chan,), jnp.float32)
    g2 = 1.0 + 0.1 * jax.random.normal(ks[8], (out_chan,), jnp.float32)
    be2 = 0.1 * jax.random.normal(ks[9], (out_chan,), jnp.float32)
    rm2 = 0.1 * jax.random.normal(ks[10], (out_chan,), jnp.float32)
    rv2 = 1.0 + 0.5 * jax.random.uniform(ks[11], (out_chan,), jnp.float32)
    wsc = 0.1 * jax.random.normal(ks[12], (out_chan, in_chan, 1, 1), jnp.float32)
    gs = 1.0 + 0.1 * jax.random.normal(ks[13], (out_chan,), jnp.float32)
    bes = 0.1 * jax.random.normal(ks[14], (out_chan,), jnp.float32)
    rms = 0.1 * jax.random.normal(ks[15], (out_chan,), jnp.float32)
    rvs = 1.0 + 0.5 * jax.random.uniform(ks[16], (out_chan,), jnp.float32)

    w1f, b1f = _fold_conv_bn(w1, b1, g1, be1, rm1, rv1, eps)           # (3,3,Ci,Co)
    w2f, b2f = _fold_conv_bn(w2, b2, g2, be2, rm2, rv2, eps)           # (3,3,Co,Co)
    wsf, bsf = _fold_conv_bn(wsc, jnp.zeros((out_chan,), jnp.float32),
                             gs, bes, rms, rvs, eps)
    return w1f, b1f, w2f, b2f, wsf[0, 0], bsf                          # ws as (Ci,Co)


def block_forward_reference(x_nchw, w1f, b1, w2f, b2, ws, bs):
    x = jnp.transpose(x_nchw, (0, 2, 3, 1)).astype(jnp.float32)
    dn = ('NHWC', 'HWIO', 'NHWC')
    h1 = lax.conv_general_dilated(x, w1f, (1, 1), 'SAME', dimension_numbers=dn) + b1
    h1 = jnp.maximum(h1, 0.0)
    h2 = lax.conv_general_dilated(h1, w2f, (1, 1), 'SAME', dimension_numbers=dn) + b2
    s = jnp.einsum('nhwc,cd->nhwd', x, ws) + bs
    y = jnp.maximum(s + h2, 0.0)
    p = lax.reduce_window(y, -jnp.inf, lax.max, (1, 2, 2, 1), (1, 2, 2, 1), 'VALID')
    return jnp.transpose(p, (0, 3, 1, 2))


if __name__ == "__main__":
    key = jax.random.PRNGKey(0)
    kx_, kp_ = jax.random.split(key)
    # N=16 with TB=8 -> grid=(2,): 128-row MXU tiles and both v7x cores busy.
    N, Cin, Cout, H, W = 16, 4, 8, 16, 16
    x = jax.random.normal(kx_, (N, Cin, H, W), jnp.float32)            # NCHW input
    params = make_block_params(kp_, Cin, Cout)

    out = block_forward_pallas(x, *params, tb=8)
    out = jax.block_until_ready(out)
    assert out.shape == (N, Cout, H // 2, W // 2), out.shape

    ref = block_forward_reference(x, *params)
    max_err = float(jnp.max(jnp.abs(out - ref)))
    # bf16 MXU operands with f32 accumulation; outputs are O(1).
    assert max_err < 5e-2, f"mismatch vs reference: {max_err}"
    print("KERNEL_OK")
</pallas_src>

<mosaic_0001>
module attributes {stable_mosaic.version = 11 : i64} {
  func.func @_block_kernel(%arg0: i32, %arg1: memref<128x64xf32, #tpu.memory_space<vmem>>, %arg2: memref<64x256xbf16, #tpu.memory_space<vmem>>, %arg3: memref<2x64x128xbf16, #tpu.memory_space<vmem>>, %arg4: memref<1x128xf32, #tpu.memory_space<vmem>>, %arg5: memref<128x128xbf16, #tpu.memory_space<vmem>>, %arg6: memref<2x128x128xbf16, #tpu.memory_space<vmem>>, %arg7: memref<1x128xf32, #tpu.memory_space<vmem>>, %arg8: memref<1x128xf32, #tpu.memory_space<vmem>>, %arg9: memref<64x128xf32, #tpu.memory_space<vmem>>, %arg10: memref<128x128xf32, #tpu.memory_space<vmem>>, %arg11: memref<32x128xf32, #tpu.memory_space<vmem>>) attributes {dimension_semantics = [#tpu.dimension_semantics<parallel>], iteration_bounds = array<i64: 2>, scalar_prefetch = 0 : i64, scratch_operands = 0 : i64, tpu.core_type = #tpu.core_type<tc>, window_params = [{transform_indices = @transform_0, window_bounds = array<i64: 128, 64>}, {pipeline_mode = #tpu.pipeline_mode<synchronous>, transform_indices = @transform_1, window_bounds = array<i64: 64, 256>}, {pipeline_mode = #tpu.pipeline_mode<synchronous>, transform_indices = @transform_2, window_bounds = array<i64: 2, 64, 128>}, {pipeline_mode = #tpu.pipeline_mode<synchronous>, transform_indices = @transform_3, window_bounds = array<i64: 1, 128>}, {pipeline_mode = #tpu.pipeline_mode<synchronous>, transform_indices = @transform_4, window_bounds = array<i64: 128, 128>}, {pipeline_mode = #tpu.pipeline_mode<synchronous>, transform_indices = @transform_5, window_bounds = array<i64: 2, 128, 128>}, {pipeline_mode = #tpu.pipeline_mode<synchronous>, transform_indices = @transform_6, window_bounds = array<i64: 1, 128>}, {pipeline_mode = #tpu.pipeline_mode<synchronous>, transform_indices = @transform_7, window_bounds = array<i64: 1, 128>}, {pipeline_mode = #tpu.pipeline_mode<synchronous>, transform_indices = @transform_8, window_bounds = array<i64: 64, 128>}, {pipeline_mode = #tpu.pipeline_mode<synchronous>, transform_indices = @transform_9, window_bounds = array<i64: 128, 128>}, {transform_indices = @transform_10, window_bounds = array<i64: 32, 128>}]} {
    %c0 = arith.constant 0 : index
    %c0_0 = arith.constant 0 : index
    %0 = vector.load %arg1[%c0, %c0_0] : memref<128x64xf32, #tpu.memory_space<vmem>>, vector<128x64xf32>
    %1 = tpu.iota {dimensions = array<i32: 0>} : vector<128x1xi32>
    %c16_i32 = arith.constant 16 : i32
    %c0_i32 = arith.constant 0 : i32
    %2 = arith.cmpi eq, %c16_i32, %c0_i32 : i32
    %c1_i32 = arith.constant 1 : i32
    %3 = arith.select %2, %c1_i32, %c16_i32 : i32
    %4 = vector.broadcast %3 : i32 to vector<128x1xi32>
    %5 = arith.remsi %1, %4 : vector<128x1xi32>
    %c0_i32_1 = arith.constant 0 : i32
    %6 = vector.broadcast %c0_i32_1 : i32 to vector<128x1xi32>
    %7 = arith.cmpi ne, %5, %6 : vector<128x1xi32>
    %c0_i32_2 = arith.constant 0 : i32
    %8 = vector.broadcast %c0_i32_2 : i32 to vector<128x1xi32>
    %9 = arith.cmpi slt, %5, %8 : vector<128x1xi32>
    %c0_i32_3 = arith.constant 0 : i32
    %10 = arith.cmpi slt, %3, %c0_i32_3 : i32
    %11 = vector.broadcast %10 : i1 to vector<128x1xi1>
    %12 = vector.broadcast %11 : vector<128x1xi1> to vector<128x1xi1>
    %13 = arith.xori %9, %12 : vector<128x1xi1>
    %14 = arith.andi %13, %7 : vector<128x1xi1>
    %15 = vector.broadcast %3 : i32 to vector<128x1xi32>
    %16 = arith.addi %5, %15 : vector<128x1xi32>
    %17 = arith.select %14, %16, %5 : vector<128x1xi1>, vector<128x1xi32>
    %c0_i32_4 = arith.constant 0 : i32
    %18 = vector.broadcast %c0_i32_4 : i32 to vector<128x1xi32>
    %19 = arith.cmpi eq, %17, %18 : vector<128x1xi32>
    %c16_i32_5 = arith.constant 16 : i32
    %c0_i32_6 = arith.constant 0 : i32
    %20 = arith.cmpi eq, %c16_i32_5, %c0_i32_6 : i32
    %c1_i32_7 = arith.constant 1 : i32
    %21 = arith.select %20, %c1_i32_7, %c16_i32_5 : i32
    %22 = vector.broadcast %21 : i32 to vector<128x1xi32>
    %23 = arith.remsi %1, %22 : vector<128x1xi32>
    %c0_i32_8 = arith.constant 0 : i32
    %24 = vector.broadcast %c0_i32_8 : i32 to vector<128x1xi32>
    %25 = arith.cmpi ne, %23, %24 : vector<128x1xi32>
    %c0_i32_9 = arith.constant 0 : i32
    %26 = vector.broadcast %c0_i32_9 : i32 to vector<128x1xi32>
    %27 = arith.cmpi slt, %23, %26 : vector<128x1xi32>
    %c0_i32_10 = arith.constant 0 : i32
    %28 = arith.cmpi slt, %21, %c0_i32_10 : i32
    %29 = vector.broadcast %28 : i1 to vector<128x1xi1>
    %30 = vector.broadcast %29 : vector<128x1xi1> to vector<128x1xi1>
    %31 = arith.xori %27, %30 : vector<128x1xi1>
    %32 = arith.andi %31, %25 : vector<128x1xi1>
    %33 = vector.broadcast %21 : i32 to vector<128x1xi32>
    %34 = arith.addi %23, %33 : vector<128x1xi32>
    %35 = arith.select %32, %34, %23 : vector<128x1xi1>, vector<128x1xi32>
    %c15_i32 = arith.constant 15 : i32
    %36 = vector.broadcast %c15_i32 : i32 to vector<128x1xi32>
    %37 = arith.cmpi eq, %35, %36 : vector<128x1xi32>
    %38 = arith.truncf %0 : vector<128x64xf32> to vector<128x64xbf16>
    %c0_11 = arith.constant 0 : index
    %c0_12 = arith.constant 0 : index
    %39 = vector.load %arg2[%c0_11, %c0_12] : memref<64x256xbf16, #tpu.memory_space<vmem>>, vector<64x256xbf16>
    %cst = arith.constant dense<0.000000e+00> : vector<128x256xf32>
    %40 = tpu.matmul %38, %39, %cst {dimension_numbers = #tpu.dot_dimension_numbers<[1], [0], [0], [1], [0, 0, 1, 1], [], []>} : vector<128x64xbf16>, vector<64x256xbf16>, vector<128x256xf32> -> vector<128x256xf32>
    %c1_i32_13 = arith.constant 1 : i32
    %41 = tpu.dynamic_rotate %0 by %c1_i32_13 dim 0 : vector<128x64xf32>, i32 -> vector<128x64xf32>
    %cst_14 = arith.constant 0.000000e+00 : f32
    %42 = vector.shape_cast %19 : vector<128x1xi1> to vector<128x1xi1>
    %43 = vector.broadcast %42 : vector<128x1xi1> to vector<128x64xi1>
    %44 = vector.broadcast %cst_14 : f32 to vector<128x64xf32>
    %45 = arith.select %43, %44, %41 : vector<128x64xi1>, vector<128x64xf32>
    %46 = arith.truncf %45 : vector<128x64xf32> to vector<128x64xbf16>
    %c0_15 = arith.constant 0 : index
    %c0_16 = arith.constant 0 : index
    %c0_17 = arith.constant 0 : index
    %47 = vector.load %arg3[%c0_15, %c0_16, %c0_17] : memref<2x64x128xbf16, #tpu.memory_space<vmem>>, vector<1x64x128xbf16>
    %48 = vector.shape_cast %47 : vector<1x64x128xbf16> to vector<64x128xbf16>
    %cst_18 = arith.constant dense<0.000000e+00> : vector<128x128xf32>
    %49 = tpu.matmul %46, %48, %cst_18 {dimension_numbers = #tpu.dot_dimension_numbers<[1], [0], [0], [1], [0, 0, 1, 1], [], []>} : vector<128x64xbf16>, vector<64x128xbf16>, vector<128x128xf32> -> vector<128x128xf32>
    %c127_i32 = arith.constant 127 : i32
    %50 = tpu.dynamic_rotate %0 by %c127_i32 dim 0 : vector<128x64xf32>, i32 -> vector<128x64xf32>
    %cst_19 = arith.constant 0.000000e+00 : f32
    %51 = vector.shape_cast %37 : vector<128x1xi1> to vector<128x1xi1>
    %52 = vector.broadcast %51 : vector<128x1xi1> to vector<128x64xi1>
    %53 = vector.broadcast %cst_19 : f32 to vector<128x64xf32>
    %54 = arith.select %52, %53, %50 : vector<128x64xi1>, vector<128x64xf32>
    %55 = arith.truncf %54 : vector<128x64xf32> to vector<128x64xbf16>
    %c1 = arith.constant 1 : index
    %c0_20 = arith.constant 0 : index
    %c0_21 = arith.constant 0 : index
    %56 = vector.load %arg3[%c1, %c0_20, %c0_21] : memref<2x64x128xbf16, #tpu.memory_space<vmem>>, vector<1x64x128xbf16>
    %57 = vector.shape_cast %56 : vector<1x64x128xbf16> to vector<64x128xbf16>
    %cst_22 = arith.constant dense<0.000000e+00> : vector<128x128xf32>
    %58 = tpu.matmul %55, %57, %cst_22 {dimension_numbers = #tpu.dot_dimension_numbers<[1], [0], [0], [1], [0, 0, 1, 1], [], []>} : vector<128x64xbf16>, vector<64x128xbf16>, vector<128x128xf32> -> vector<128x128xf32>
    %59 = vector.extract_strided_slice %40 {offsets = [0, 0], sizes = [128, 128], strides = [1, 1]} : vector<128x256xf32> to vector<128x128xf32>
    %60 = arith.addf %59, %49 : vector<128x128xf32>
    %61 = arith.addf %60, %58 : vector<128x128xf32>
    %c0_23 = arith.constant 0 : index
    %c0_24 = arith.constant 0 : index
    %62 = vector.load %arg4[%c0_23, %c0_24] : memref<1x128xf32, #tpu.memory_space<vmem>>, vector<1x128xf32>
    %63 = vector.broadcast %62 : vector<1x128xf32> to vector<128x128xf32>
    %64 = arith.addf %61, %63 : vector<128x128xf32>
    %cst_25 = arith.constant 0.000000e+00 : f32
    %65 = vector.broadcast %cst_25 : f32 to vector<128x128xf32>
    %66 = arith.maximumf %64, %65 : vector<128x128xf32>
    %67 = vector.extract_strided_slice %40 {offsets = [0, 128], sizes = [128, 128], strides = [1, 1]} : vector<128x256xf32> to vector<128x128xf32>
    %c0_26 = arith.constant 0 : index
    %c0_27 = arith.constant 0 : index
    %68 = vector.load %arg8[%c0_26, %c0_27] : memref<1x128xf32, #tpu.memory_space<vmem>>, vector<1x128xf32>
    %69 = vector.broadcast %68 : vector<1x128xf32> to vector<128x128xf32>
    %70 = arith.addf %67, %69 : vector<128x128xf32>
    %71 = arith.truncf %66 : vector<128x128xf32> to vector<128x128xbf16>
    %c0_28 = arith.constant 0 : index
    %c0_29 = arith.constant 0 : index
    %72 = vector.load %arg5[%c0_28, %c0_29] : memref<128x128xbf16, #tpu.memory_space<vmem>>, vector<128x128xbf16>
    %cst_30 = arith.constant dense<0.000000e+00> : vector<128x128xf32>
    %73 = tpu.matmul %71, %72, %cst_30 {dimension_numbers = #tpu.dot_dimension_numbers<[1], [0], [0], [1], [0, 0, 1, 1], [], []>} : vector<128x128xbf16>, vector<128x128xbf16>, vector<128x128xf32> -> vector<128x128xf32>
    %c1_i32_31 = arith.constant 1 : i32
    %74 = tpu.dynamic_rotate %66 by %c1_i32_31 dim 0 : vector<128x128xf32>, i32 -> vector<128x128xf32>
    %cst_32 = arith.constant 0.000000e+00 : f32
    %75 = vector.shape_cast %19 : vector<128x1xi1> to vector<128x1xi1>
    %76 = vector.broadcast %75 : vector<128x1xi1> to vector<128x128xi1>
    %77 = vector.broadcast %cst_32 : f32 to vector<128x128xf32>
    %78 = arith.select %76, %77, %74 : vector<128x128xi1>, vector<128x128xf32>
    %79 = arith.truncf %78 : vector<128x128xf32> to vector<128x128xbf16>
    %c0_33 = arith.constant 0 : index
    %c0_34 = arith.constant 0 : index
    %c0_35 = arith.constant 0 : index
    %80 = vector.load %arg6[%c0_33, %c0_34, %c0_35] : memref<2x128x128xbf16, #tpu.memory_space<vmem>>, vector<1x128x128xbf16>
    %81 = vector.shape_cast %80 : vector<1x128x128xbf16> to vector<128x128xbf16>
    %cst_36 = arith.constant dense<0.000000e+00> : vector<128x128xf32>
    %82 = tpu.matmul %79, %81, %cst_36 {dimension_numbers = #tpu.dot_dimension_numbers<[1], [0], [0], [1], [0, 0, 1, 1], [], []>} : vector<128x128xbf16>, vector<128x128xbf16>, vector<128x128xf32> -> vector<128x128xf32>
    %c127_i32_37 = arith.constant 127 : i32
    %83 = tpu.dynamic_rotate %66 by %c127_i32_37 dim 0 : vector<128x128xf32>, i32 -> vector<128x128xf32>
    %cst_38 = arith.constant 0.000000e+00 : f32
    %84 = vector.shape_cast %37 : vector<128x1xi1> to vector<128x1xi1>
    %85 = vector.broadcast %84 : vector<128x1xi1> to vector<128x128xi1>
    %86 = vector.broadcast %cst_38 : f32 to vector<128x128xf32>
    %87 = arith.select %85, %86, %83 : vector<128x128xi1>, vector<128x128xf32>
    %88 = arith.truncf %87 : vector<128x128xf32> to vector<128x128xbf16>
    %c1_39 = arith.constant 1 : index
    %c0_40 = arith.constant 0 : index
    %c0_41 = arith.constant 0 : index
    %89 = vector.load %arg6[%c1_39, %c0_40, %c0_41] : memref<2x128x128xbf16, #tpu.memory_space<vmem>>, vector<1x128x128xbf16>
    %90 = vector.shape_cast %89 : vector<1x128x128xbf16> to vector<128x128xbf16>
    %cst_42 = arith.constant dense<0.000000e+00> : vector<128x128xf32>
    %91 = tpu.matmul %88, %90, %cst_42 {dimension_numbers = #tpu.dot_dimension_numbers<[1], [0], [0], [1], [0, 0, 1, 1], [], []>} : vector<128x128xbf16>, vector<128x128xbf16>, vector<128x128xf32> -> vector<128x128xf32>
    %92 = arith.addf %73, %82 : vector<128x128xf32>
    %93 = arith.addf %92, %91 : vector<128x128xf32>
    %c0_43 = arith.constant 0 : index
    %c0_44 = arith.constant 0 : index
    %94 = vector.load %arg7[%c0_43, %c0_44] : memref<1x128xf32, #tpu.memory_space<vmem>>, vector<1x128xf32>
    %95 = vector.broadcast %94 : vector<1x128xf32> to vector<128x128xf32>
    %96 = arith.addf %93, %95 : vector<128x128xf32>
    %97 = arith.addf %70, %96 : vector<128x128xf32>
    %cst_45 = arith.constant 0.000000e+00 : f32
    %98 = vector.broadcast %cst_45 : f32 to vector<128x128xf32>
    %99 = arith.maximumf %97, %98 : vector<128x128xf32>
    %c127_i32_46 = arith.constant 127 : i32
    %100 = tpu.dynamic_rotate %99 by %c127_i32_46 dim 0 : vector<128x128xf32>, i32 -> vector<128x128xf32>
    %101 = arith.maximumf %99, %100 : vector<128x128xf32>
    %c0_47 = arith.constant 0 : index
    %c0_48 = arith.constant 0 : index
    %102 = vector.load %arg9[%c0_47, %c0_48] : memref<64x128xf32, #tpu.memory_space<vmem>>, vector<64x128xf32>
    %cst_49 = arith.constant dense<0.000000e+00> : vector<64x128xf32>
    %103 = tpu.matmul %102, %101, %cst_49 {dimension_numbers = #tpu.dot_dimension_numbers<[1], [0], [0], [1], [0, 0, 1, 1], [], []>} : vector<64x128xf32>, vector<128x128xf32>, vector<64x128xf32> -> vector<64x128xf32>
    %c0_50 = arith.constant 0 : index
    %c0_51 = arith.constant 0 : index
    %104 = vector.load %arg10[%c0_50, %c0_51] : memref<128x128xf32, #tpu.memory_space<vmem>>, vector<128x128xf32>
    %cst_52 = arith.constant dense<0.000000e+00> : vector<64x128xf32>
    %105 = tpu.matmul %103, %104, %cst_52 {dimension_numbers = #tpu.dot_dimension_numbers<[1], [0], [0], [1], [0, 0, 1, 1], [], []>} : vector<64x128xf32>, vector<128x128xf32>, vector<64x128xf32> -> vector<64x128xf32>
    %c64_i32 = arith.constant 64 : i32
    %106 = tpu.dynamic_rotate %105 by %c64_i32 dim 1 : vector<64x128xf32>, i32 -> vector<64x128xf32>
    %107 = arith.maximumf %105, %106 : vector<64x128xf32>
    %108 = tpu.iota {dimensions = array<i32: 1>} : vector<32x128xi32>
    %c64_i32_53 = arith.constant 64 : i32
    %109 = vector.broadcast %c64_i32_53 : i32 to vector<32x128xi32>
    %110 = arith.cmpi slt, %108, %109 : vector<32x128xi32>
    %111 = vector.extract_strided_slice %107 {offsets = [0, 0], sizes = [32, 128], strides = [1, 1]} : vector<64x128xf32> to vector<32x128xf32>
    %112 = vector.extract_strided_slice %107 {offsets = [32, 0], sizes = [32, 128], strides = [1, 1]} : vector<64x128xf32> to vector<32x128xf32>
    %113 = arith.select %110, %111, %112 : vector<32x128xi1>, vector<32x128xf32>
    %c0_54 = arith.constant 0 : index
    %c0_55 = arith.constant 0 : index
    %114 = vector.load %arg11[%c0_54, %c0_55] : memref<32x128xf32, #tpu.memory_space<vmem>>, vector<32x128xf32>
    tpu.vector_store %arg11[%c0_54, %c0_55], %113 {strides = array<i32>} : memref<32x128xf32, #tpu.memory_space<vmem>>, vector<32x128xf32>,
    return
  }
  func.func @transform_0(%arg0: i32) -> (i32, i32) {
    %c0_i32 = arith.constant 0 : i32
    %c0_i32_0 = arith.constant 0 : i32
    return %arg0, %c0_i32 : i32, i32
  }
  func.func @transform_1(%arg0: i32) -> (i32, i32) {
    %c0_i32 = arith.constant 0 : i32
    %c0_i32_0 = arith.constant 0 : i32
    %c0_i32_1 = arith.constant 0 : i32
    return %c0_i32, %c0_i32_0 : i32, i32
  }
  func.func @transform_2(%arg0: i32) -> (i32, i32, i32) {
    %c0_i32 = arith.constant 0 : i32
    %c0_i32_0 = arith.constant 0 : i32
    %c0_i32_1 = arith.constant 0 : i32
    %c0_i32_2 = arith.constant 0 : i32
    return %c0_i32, %c0_i32_0, %c0_i32_1 : i32, i32, i32
  }
  func.func @transform_3(%arg0: i32) -> (i32, i32) {
    %c0_i32 = arith.constant 0 : i32
    %c0_i32_0 = arith.constant 0 : i32
    %c0_i32_1 = arith.constant 0 : i32
    return %c0_i32, %c0_i32_0 : i32, i32
  }
  func.func @transform_4(%arg0: i32) -> (i32, i32) {
    %c0_i32 = arith.constant 0 : i32
    %c0_i32_0 = arith.constant 0 : i32
    %c0_i32_1 = arith.constant 0 : i32
    return %c0_i32, %c0_i32_0 : i32, i32
  }
  func.func @transform_5(%arg0: i32) -> (i32, i32, i32) {
    %c0_i32 = arith.constant 0 : i32
    %c0_i32_0 = arith.constant 0 : i32
    %c0_i32_1 = arith.constant 0 : i32
    %c0_i32_2 = arith.constant 0 : i32
    return %c0_i32, %c0_i32_0, %c0_i32_1 : i32, i32, i32
  }
  func.func @transform_6(%arg0: i32) -> (i32, i32) {
    %c0_i32 = arith.constant 0 : i32
    %c0_i32_0 = arith.constant 0 : i32
    %c0_i32_1 = arith.constant 0 : i32
    return %c0_i32, %c0_i32_0 : i32, i32
  }
  func.func @transform_7(%arg0: i32) -> (i32, i32) {
    %c0_i32 = arith.constant 0 : i32
    %c0_i32_0 = arith.constant 0 : i32
    %c0_i32_1 = arith.constant 0 : i32
    return %c0_i32, %c0_i32_0 : i32, i32
  }
  func.func @transform_8(%arg0: i32) -> (i32, i32) {
    %c0_i32 = arith.constant 0 : i32
    %c0_i32_0 = arith.constant 0 : i32
    %c0_i32_1 = arith.constant 0 : i32
    return %c0_i32, %c0_i32_0 : i32, i32
  }
  func.func @transform_9(%arg0: i32) -> (i32, i32) {
    %c0_i32 = arith.constant 0 : i32
    %c0_i32_0 = arith.constant 0 : i32
    %c0_i32_1 = arith.constant 0 : i32
    return %c0_i32, %c0_i32_0 : i32, i32
  }
  func.func @transform_10(%arg0: i32) -> (i32, i32) {
    %c0_i32 = arith.constant 0 : i32
    %c0_i32_0 = arith.constant 0 : i32
    return %arg0, %c0_i32 : i32, i32
  }
}

</mosaic_0001>

<llo_original>
// kernel: tile.18
$region0: #{tile.18}
  #allocation0 [shape = 's32[1]{0}', space=sflag, size = 0x4, scoped, tag = 'scoped memory for tile.18']
  %s0 = inlined_call_operand.vmem [shape: f32[8], index: 0, kind: input, shape index: {}]
  %s1 = inlined_call_operand.vmem [shape: f32[16,8], index: 1, kind: output, shape index: {}]
  // Predicated region
  $region2: #{tile.18} parent=0 // pred_check
    _
  $region3: #{tile.18} parent=0 // pred_check_branch
    %3 = sbr.rel (0) target = $region5
  $region4: #{tile.18} parent=0 // pred_region
    _
  $region5: #{tile.18} parent=0 // pred_fallthru
    _
  %v4 = vld [vmem:[%s0] ss:$0 sm:$0xff]
  %5 = vst [vmem:[%s1] sm:$0xff] %v4
  %s6 = scalar_lea.vmem %s1, 8
  %7 = vst [vmem:[%s6] sm:$0xff] %v4

// kernel: tile.19
$region0: #{tile.19}
  %s0 = inlined_call_operand.vmem [shape: f32[16,8], index: 0, kind: input, shape index: {}]
  %s1 = inlined_call_operand.vmem [shape: f32[1,128], index: 1, kind: output, shape index: {}]
  $region1: #{tile.19} parent=0
    #allocation0 [shape = 'u8[4096]{0}', space=vmem, size = 0x1000, scoped, tag = 'scoped mem for output reshape']
    %v2 = vld [vmem:[%s0] sm:$0x1]
    %vm3 = vcmask 64512
    %4 = vst.msk [vmem:[#allocation0] sm:$0x1] %vm3, %v2
    %s5 = scalar_lea.vmem %s0, 15
    %v6 = vld [vmem:[%s5] sm:$0x1]
    %7 = vrot.lane.b32.xlu0 %v6, 120
    %v8 = vpop.permute.xlu0 %7
    %vm9 = vcmask 1048512
    %10 = vst.msk [vmem:[#allocation0] sm:$0x1] %vm9, %v8
    %s11 = scalar_lea.vmem %s0, 14
    %v12 = vld [vmem:[%s11] sm:$0x1]
    %13 = vrot.lane.b32.xlu0 %v12, 112
    %v14 = vpop.permute.xlu0 %13
    %vm15 = vcmask 982912
    %16 = vst.msk [vmem:[#allocation0] sm:$0x1] %vm15, %v14
    %s17 = scalar_lea.vmem %s0, 13
    %v18 = vld [vmem:[%s17] sm:$0x1]
    %19 = vrot.lane.b32.xlu0 %v18, 104
    %v20 = vpop.permute.xlu0 %19
    %vm21 = vcmask 917312
    %22 = vst.msk [vmem:[#allocation0] sm:$0x1] %vm21, %v20
    %s23 = scalar_lea.vmem %s0, 12
    %v24 = vld [vmem:[%s23] sm:$0x1]
    %25 = vrot.lane.b32.xlu0 %v24, 96
    %v26 = vpop.permute.xlu0 %25
    %vm27 = vcmask 851712
    %28 = vst.msk [vmem:[#allocation0] sm:$0x1] %vm27, %v26
    %s29 = scalar_lea.vmem %s0, 11
    %v30 = vld [vmem:[%s29] sm:$0x1]
    %31 = vrot.lane.b32.xlu0 %v30, 88
    %v32 = vpop.permute.xlu0 %31
    %vm33 = vcmask 786112
    %34 = vst.msk [vmem:[#allocation0] sm:$0x1] %vm33, %v32
    %s35 = scalar_lea.vmem %s0, 10
    %v36 = vld [vmem:[%s35] sm:$0x1]
    %37 = vrot.lane.b32.xlu0 %v36, 80
    %v38 = vpop.permute.xlu0 %37
    %vm39 = vcmask 720512
    %40 = vst.msk [vmem:[#allocation0] sm:$0x1] %vm39, %v38
    %s41 = scalar_lea.vmem %s0, 9
    %v42 = vld [vmem:[%s41] sm:$0x1]
    %43 = vrot.lane.b32.xlu0 %v42, 72
    %v44 = vpop.permute.xlu0 %43
    %vm45 = vcmask 654912
    %46 = vst.msk [vmem:[#allocation0] sm:$0x1] %vm45, %v44
    %s47 = scalar_lea.vmem %s0, 8
    %v48 = vld [vmem:[%s47] sm:$0x1]
    %49 = vrot.lane.b32.xlu0 %v48, 64
    %v50 = vpop.permute.xlu0 %49
    %vm51 = vcmask 589312
    %52 = vst.msk [vmem:[#allocation0] sm:$0x1] %vm51, %v50
    %s53 = scalar_lea.vmem %s0, 7
    %v54 = vld [vmem:[%s53] sm:$0x1]
    %55 = vrot.lane.b32.xlu0 %v54, 56
    %v56 = vpop.permute.xlu0 %55
    %vm57 = vcmask 523712
    %58 = vst.msk [vmem:[#allocation0] sm:$0x1] %vm57, %v56
    %s59 = scalar_lea.vmem %s0, 6
    %v60 = vld [vmem:[%s59] sm:$0x1]
    %61 = vrot.lane.b32.xlu0 %v60, 48
    %v62 = vpop.permute.xlu0 %61
    %vm63 = vcmask 458112
    %64 = vst.msk [vmem:[#allocation0] sm:$0x1] %vm63, %v62
    %s65 = scalar_lea.vmem %s0, 5
    %v66 = vld [vmem:[%s65] sm:$0x1]
    %67 = vrot.lane.b32.xlu0 %v66, 40
    %v68 = vpop.permute.xlu0 %67
    %vm69 = vcmask 392512
    %70 = vst.msk [vmem:[#allocation0] sm:$0x1] %vm69, %v68
    %s71 = scalar_lea.vmem %s0, 4
    %v72 = vld [vmem:[%s71] sm:$0x1]
    %73 = vrot.lane.b32.xlu0 %v72, 32
    %v74 = vpop.permute.xlu0 %73
    %vm75 = vcmask 326912
    %76 = vst.msk [vmem:[#allocation0] sm:$0x1] %vm75, %v74
    %s77 = scalar_lea.vmem %s0, 3
    %v78 = vld [vmem:[%s77] sm:$0x1]
    %79 = vrot.lane.b32.xlu0 %v78, 24
    %v80 = vpop.permute.xlu0 %79
    %vm81 = vcmask 261312
    %82 = vst.msk [vmem:[#allocation0] sm:$0x1] %vm81, %v80
    %s83 = scalar_lea.vmem %s0, 2
    %v84 = vld [vmem:[%s83] sm:$0x1]
    %85 = vrot.lane.b32.xlu0 %v84, 16
    %v86 = vpop.permute.xlu0 %85
    %vm87 = vcmask 195712
    %88 = vst.msk [vmem:[#allocation0] sm:$0x1] %vm87, %v86
    %s89 = scalar_lea.vmem %s0, 1
    %v90 = vld [vmem:[%s89] sm:$0x1]
    %91 = vrot.lane.b32.xlu0 %v90, 8
    %v92 = vpop.permute.xlu0 %91
    %vm93 = vcmask 130112
    %94 = vst.msk [vmem:[#allocation0] sm:$0x1] %vm93, %v92
    %s96 = ssub.s32 2, 1
    %v97 = vld [vmem:[#allocation0] sm:%s96]
    %s99 = ssub.s32 2, 1
    %100 = vst [vmem:[%s1] sm:%s99] %v97

// kernel: block_forward_pallas.1
$region0: #{block_forward_pallas.1}
  #allocation0 [shape = 'u32[]', space=smem, size = 0x4, offset = 0x4, fixed_abs, tag = 'smem constant byte address 0x4 - core index']
  #allocation1 [shape = 'u32[72,128]{1,0:T(1,128)}', space=vmem, size = 0x9000, scoped, tag = 'internal scratch']
  %s0 = inlined_call_operand.vmem [shape: f32[256,64], index: 0, kind: input, shape index: {}]
  %s1 = inlined_call_operand.vmem [shape: bf16[64,256], index: 1, kind: input, shape index: {}]
  %s2 = inlined_call_operand.vmem [shape: bf16[2,64,128], index: 2, kind: input, shape index: {}]
  %s3 = inlined_call_operand.vmem [shape: f32[1,128], index: 3, kind: input, shape index: {}]
  %s4 = inlined_call_operand.vmem [shape: bf16[128,128], index: 4, kind: input, shape index: {}]
  %s5 = inlined_call_operand.vmem [shape: bf16[2,128,128], index: 5, kind: input, shape index: {}]
  %s6 = inlined_call_operand.vmem [shape: f32[1,128], index: 6, kind: input, shape index: {}]
  %s7 = inlined_call_operand.vmem [shape: f32[1,128], index: 7, kind: input, shape index: {}]
  %s8 = inlined_call_operand.vmem [shape: f32[64,128], index: 8, kind: input, shape index: {}]
  %s9 = inlined_call_operand.vmem [shape: f32[128,128], index: 9, kind: input, shape index: {}]
  %s10 = inlined_call_operand.vmem [shape: f32[64,128], index: 10, kind: output, shape index: {}]
  %s11 = sld [smem:[#allocation0]]
  $region73: #{block_forward_pallas.1} parent=0
    _
  %s13 = ssub.s32 1, %s11
  %s14 = scalar_select 0, %s13, %s11
  loop: start=0, step=1, limit=4
  $region2: #{block_forward_pallas.1} parent=0 // loop_pre_header
    _
  $region3: #{block_forward_pallas.1} parent=0 // loop_header
    %s16 = sphi 0, %s20
    %p17 = scmp.ge.s32.totalorder %s16, 4
    %s26 = sphi 0, %s28
    %s29 = sphi 0, %s26
    %s30 = sphi 0, %s29
    %s46 = sphi 0, %s30
    %s50 = sphi 0, %s50
    %s52 = sphi 0, %s50
    %s53 = sphi 0, %s52
    %s67 = sphi 0, %s53
    %s71 = sphi 0, %s71
    %s73 = sphi 0, %s71
    %s74 = sphi 0, %s73
    %s88 = sphi 0, %s74
    %s92 = sphi 0, %s92
    %s94 = sphi 0, %s92
    %s95 = sphi 0, %s94
    %s109 = sphi 0, %s95
    %s113 = sphi 0, %s113
    %s115 = sphi 0, %s113
    %s116 = sphi 0, %s115
    %s130 = sphi 0, %s116
    %s134 = sphi 0, %s134
    %s136 = sphi 0, %s134
    %s137 = sphi 0, %s136
    %s151 = sphi 0, %s137
    %s155 = sphi 0, %s155
    %s157 = sphi 0, %s155
    %s158 = sphi 0, %s157
    %s172 = sphi 0, %s158
    %s176 = sphi 0, %s176
    %s178 = sphi 0, %s176
    %s179 = sphi 0, %s178
    %s193 = sphi 0, %s179
    %s197 = sphi 0, %s197
    %s199 = sphi 0, %s197
    %s200 = sphi 0, %s199
    %s214 = sphi 0, %s200
    %s218 = sphi 0, %s218
    %s220 = sphi 0, %s218
    %s221 = sphi 0, %s220
    %s235 = sphi 0, %s221
    %s241 = sphi 0, %s243
    %s244 = sphi 0, %s241
    %s245 = sphi 0, %s244
    %s261 = sphi 0, %s245
  $region4: #{block_forward_pallas.1} parent=0 // loop_header_branch
    %19 = sbr.rel (%p17) target = $region8
  $region5: #{block_forward_pallas.1} parent=0 // loop_body
    %s21 = ssub.s32 %s16, 1
    %s22 = ssub.s32 %s16, 2
    %s23 = sadd.s32 %s16, 1
    %s24 = ssub.s32 %s16, %s23
    %p25 = scmp.eq.s32.totalorder %s24, 0
    %s27 = sadd.s32 %s26, 1
    %s28 = scalar_select %p25, %s26, %s27
    %p31 = pneg %p25
    %p32 = scmp.eq.s32.totalorder %s16, 1
    %p33 = por %p31, %p32
    %p34 = scmp.ne.s32.totalorder %s26, %s29
    %p35 = scmp.eq.s32.totalorder %s16, 0
    %p36 = por %p34, %p35
    %p37 = scmp.ne.s32.totalorder %s26, %s29
    %p38 = scmp.eq.s32.totalorder %s21, 1
    %p39 = por %p37, %p38
    %p40 = scmp.ne.s32.totalorder %s29, %s30
    %p41 = scmp.eq.s32.totalorder %s21, 0
    %p42 = por %p40, %p41
    %p43 = scmp.ne.s32.totalorder %s29, %s30
    %p44 = scmp.eq.s32.totalorder %s22, 1
    %p45 = por %p43, %p44
    %p47 = scmp.ne.s32.totalorder %s30, %s46
    %p48 = scmp.eq.s32.totalorder %s22, 0
    %p49 = por %p47, %p48
    %s51 = sadd.s32 %s50, 1
    %p54 = scmp.eq.s32.totalorder %s16, 1
    %p55 = scmp.ne.s32.totalorder %s50, %s52
    %p56 = scmp.eq.s32.totalorder %s16, 0
    %p57 = por %p55, %p56
    %p58 = scmp.ne.s32.totalorder %s50, %s52
    %p59 = scmp.eq.s32.totalorder %s21, 1
    %p60 = por %p58, %p59
    %p61 = scmp.ne.s32.totalorder %s52, %s53
    %p62 = scmp.eq.s32.totalorder %s21, 0
    %p63 = por %p61, %p62
    %p64 = scmp.ne.s32.totalorder %s52, %s53
    %p65 = scmp.eq.s32.totalorder %s22, 1
    %p66 = por %p64, %p65
    %p68 = scmp.ne.s32.totalorder %s53, %s67
    %p69 = scmp.eq.s32.totalorder %s22, 0
    %p70 = por %p68, %p69
    %s72 = sadd.s32 %s71, 1
    %p75 = scmp.eq.s32.totalorder %s16, 1
    %p76 = scmp.ne.s32.totalorder %s71, %s73
    %p77 = scmp.eq.s32.totalorder %s16, 0
    %p78 = por %p76, %p77
    %p79 = scmp.ne.s32.totalorder %s71, %s73
    %p80 = scmp.eq.s32.totalorder %s21, 1
    %p81 = por %p79, %p80
    %p82 = scmp.ne.s32.totalorder %s73, %s74
    %p83 = scmp.eq.s32.totalorder %s21, 0
    %p84 = por %p82, %p83
    %p85 = scmp.ne.s32.totalorder %s73, %s74
    %p86 = scmp.eq.s32.totalorder %s22, 1
    %p87 = por %p85, %p86
    %p89 = scmp.ne.s32.totalorder %s74, %s88
    %p90 = scmp.eq.s32.totalorder %s22, 0
    %p91 = por %p89, %p90
    %s93 = sadd.s32 %s92, 1
    %p96 = scmp.eq.s32.totalorder %s16, 1
    %p97 = scmp.ne.s32.totalorder %s92, %s94
    %p98 = scmp.eq.s32.totalorder %s16, 0
    %p99 = por %p97, %p98
    %p100 = scmp.ne.s32.totalorder %s92, %s94
    %p101 = scmp.eq.s32.totalorder %s21, 1
    %p102 = por %p100, %p101
    %p103 = scmp.ne.s32.totalorder %s94, %s95
    %p104 = scmp.eq.s32.totalorder %s21, 0
    %p105 = por %p103, %p104
    %p106 = scmp.ne.s32.totalorder %s94, %s95
    %p107 = scmp.eq.s32.totalorder %s22, 1
    %p108 = por %p106, %p107
    %p110 = scmp.ne.s32.totalorder %s95, %s109
    %p111 = scmp.eq.s32.totalorder %s22, 0
    %p112 = por %p110, %p111
    %s114 = sadd.s32 %s113, 1
    %p117 = scmp.eq.s32.totalorder %s16, 1
    %p118 = scmp.ne.s32.totalorder %s113, %s115
    %p119 = scmp.eq.s32.totalorder %s16, 0
    %p120 = por %p118, %p119
    %p121 = scmp.ne.s32.totalorder %s113, %s115
    %p122 = scmp.eq.s32.totalorder %s21, 1
    %p123 = por %p121, %p122
    %p124 = scmp.ne.s32.totalorder %s115, %s116
    %p125 = scmp.eq.s32.totalorder %s21, 0
    %p126 = por %p124, %p125
    %p127 = scmp.ne.s32.totalorder %s115, %s116
    %p128 = scmp.eq.s32.totalorder %s22, 1
    %p129 = por %p127, %p128
    %p131 = scmp.ne.s32.totalorder %s116, %s130
    %p132 = scmp.eq.s32.totalorder %s22, 0
    %p133 = por %p131, %p132
    %s135 = sadd.s32 %s134, 1
    %p138 = scmp.eq.s32.totalorder %s16, 1
    %p139 = scmp.ne.s32.totalorder %s134, %s136
    %p140 = scmp.eq.s32.totalorder %s16, 0
    %p141 = por %p139, %p140
    %p142 = scmp.ne.s32.totalorder %s134, %s136
    %p143 = scmp.eq.s32.totalorder %s21, 1
    %p144 = por %p142, %p143
    %p145 = scmp.ne.s32.totalorder %s136, %s137
    %p146 = scmp.eq.s32.totalorder %s21, 0
    %p147 = por %p145, %p146
    %p148 = scmp.ne.s32.totalorder %s136, %s137
    %p149 = scmp.eq.s32.totalorder %s22, 1
    %p150 = por %p148, %p149
    %p152 = scmp.ne.s32.totalorder %s137, %s151
    %p153 = scmp.eq.s32.totalorder %s22, 0
    %p154 = por %p152, %p153
    %s156 = sadd.s32 %s155, 1
    %p159 = scmp.eq.s32.totalorder %s16, 1
    %p160 = scmp.ne.s32.totalorder %s155, %s157
    %p161 = scmp.eq.s32.totalorder %s16, 0
    %p162 = por %p160, %p161
    %p163 = scmp.ne.s32.totalorder %s155, %s157
    %p164 = scmp.eq.s32.totalorder %s21, 1
    %p165 = por %p163, %p164
    %p166 = scmp.ne.s32.totalorder %s157, %s158
    %p167 = scmp.eq.s32.totalorder %s21, 0
    %p168 = por %p166, %p167
    %p169 = scmp.ne.s32.totalorder %s157, %s158
    %p170 = scmp.eq.s32.totalorder %s22, 1
    %p171 = por %p169, %p170
    %p173 = scmp.ne.s32.totalorder %s158, %s172
    %p174 = scmp.eq.s32.totalorder %s22, 0
    %p175 = por %p173, %p174
    %s177 = sadd.s32 %s176, 1
    %p180 = scmp.eq.s32.totalorder %s16, 1
    %p181 = scmp.ne.s32.totalorder %s176, %s178
    %p182 = scmp.eq.s32.totalorder %s16, 0
    %p183 = por %p181, %p182
    %p184 = scmp.ne.s32.totalorder %s176, %s178
    %p185 = scmp.eq.s32.totalorder %s21, 1
    %p186 = por %p184, %p185
    %p187 = scmp.ne.s32.totalorder %s178, %s179
    %p188 = scmp.eq.s32.totalorder %s21, 0
    %p189 = por %p187, %p188
    %p190 = scmp.ne.s32.totalorder %s178, %s179
    %p191 = scmp.eq.s32.totalorder %s22, 1
    %p192 = por %p190, %p191
    %p194 = scmp.ne.s32.totalorder %s179, %s193
    %p195 = scmp.eq.s32.totalorder %s22, 0
    %p196 = por %p194, %p195
    %s198 = sadd.s32 %s197, 1
    %p201 = scmp.eq.s32.totalorder %s16, 1
    %p202 = scmp.ne.s32.totalorder %s197, %s199
    %p203 = scmp.eq.s32.totalorder %s16, 0
    %p204 = por %p202, %p203
    %p205 = scmp.ne.s32.totalorder %s197, %s199
    %p206 = scmp.eq.s32.totalorder %s21, 1
    %p207 = por %p205, %p206
    %p208 = scmp.ne.s32.totalorder %s199, %s200
    %p209 = scmp.eq.s32.totalorder %s21, 0
    %p210 = por %p208, %p209
    %p211 = scmp.ne.s32.totalorder %s199, %s200
    %p212 = scmp.eq.s32.totalorder %s22, 1
    %p213 = por %p211, %p212
    %p215 = scmp.ne.s32.totalorder %s200, %s214
    %p216 = scmp.eq.s32.totalorder %s22, 0
    %p217 = por %p215, %p216
    %s219 = sadd.s32 %s218, 1
    %p222 = scmp.eq.s32.totalorder %s16, 1
    %p223 = scmp.ne.s32.totalorder %s218, %s220
    %p224 = scmp.eq.s32.totalorder %s16, 0
    %p225 = por %p223, %p224
    %p226 = scmp.ne.s32.totalorder %s218, %s220
    %p227 = scmp.eq.s32.totalorder %s21, 1
    %p228 = por %p226, %p227
    %p229 = scmp.ne.s32.totalorder %s220, %s221
    %p230 = scmp.eq.s32.totalorder %s21, 0
    %p231 = por %p229, %p230
    %p232 = scmp.ne.s32.totalorder %s220, %s221
    %p233 = scmp.eq.s32.totalorder %s22, 1
    %p234 = por %p232, %p233
    %p236 = scmp.ne.s32.totalorder %s221, %s235
    %p237 = scmp.eq.s32.totalorder %s22, 0
    %p238 = por %p236, %p237
    %s239 = ssub.s32 %s16, %s23
    %p240 = scmp.eq.s32.totalorder %s239, 0
    %s242 = sadd.s32 %s241, 1
    %s243 = scalar_select %p240, %s241, %s242
    %p246 = pneg %p240
    %p247 = scmp.eq.s32.totalorder %s16, 1
    %p248 = por %p246, %p247
    %p249 = scmp.ne.s32.totalorder %s241, %s244
    %p250 = scmp.eq.s32.totalorder %s16, 0
    %p251 = por %p249, %p250
    %p252 = scmp.ne.s32.totalorder %s241, %s244
    %p253 = scmp.eq.s32.totalorder %s21, 1
    %p254 = por %p252, %p253
    %p255 = scmp.ne.s32.totalorder %s244, %s245
    %p256 = scmp.eq.s32.totalorder %s21, 0
    %p257 = por %p255, %p256
    %p258 = scmp.ne.s32.totalorder %s244, %s245
    %p259 = scmp.eq.s32.totalorder %s22, 1
    %p260 = por %p258, %p259
    %p262 = scmp.ne.s32.totalorder %s245, %s261
    %p263 = scmp.eq.s32.totalorder %s22, 0
    %p264 = por %p262, %p263
    %p265 = scmp.le.s32.totalorder 1, %s16
    %p266 = scmp.lt.s32.totalorder %s16, 3
    %p267 = pnand %p265, %p266
    %p268 = pneg %p267
    // Predicated region
    $region9: #{block_forward_pallas.1} parent=5 // pred_check
      _
    $region10: #{block_forward_pallas.1} parent=5 // pred_check_branch
      %270 = sbr.rel (%p267) target = $region12
    $region11: #{block_forward_pallas.1} parent=5 // pred_region
      %s271 = ssub.s32 %s16, 1
      // Predicated region
      $region13: #{block_forward_pallas.1} parent=11 // pred_check
        %p272 = pneg %p63
      $region14: #{block_forward_pallas.1} parent=11 // pred_check_branch
        %274 = sbr.rel (%p272) target = $region16
      $region15: #{block_forward_pallas.1} parent=11 // pred_region
        _
      $region16: #{block_forward_pallas.1} parent=11 // pred_fallthru
        _
      // Predicated region
      $region17: #{block_forward_pallas.1} parent=11 // pred_check
        %p275 = pneg %p84
      $region18: #{block_forward_pallas.1} parent=11 // pred_check_branch
        %277 = sbr.rel (%p275) target = $region20
      $region19: #{block_forward_pallas.1} parent=11 // pred_region
        _
      $region20: #{block_forward_pallas.1} parent=11 // pred_fallthru
        _
      // Predicated region
      $region21: #{block_forward_pallas.1} parent=11 // pred_check
        %p278 = pneg %p105
      $region22: #{block_forward_pallas.1} parent=11 // pred_check_branch
        %280 = sbr.rel (%p278) target = $region24
      $region23: #{block_forward_pallas.1} parent=11 // pred_region
        _
      $region24: #{block_forward_pallas.1} parent=11 // pred_fallthru
        _
      // Predicated region
      $region25: #{block_forward_pallas.1} parent=11 // pred_check
        %p281 = pneg %p126
      $region26: #{block_forward_pallas.1} parent=11 // pred_check_branch
        %283 = sbr.rel (%p281) target = $region28
      $region27: #{block_forward_pallas.1} parent=11 // pred_region
        _
      $region28: #{block_forward_pallas.1} parent=11 // pred_fallthru
        _
      // Predicated region
      $region29: #{block_forward_pallas.1} parent=11 // pred_check
        %p284 = pneg %p147
      $region30: #{block_forward_pallas.1} parent=11 // pred_check_branch
        %286 = sbr.rel (%p284) target = $region32
      $region31: #{block_forward_pallas.1} parent=11 // pred_region
        _
      $region32: #{block_forward_pallas.1} parent=11 // pred_fallthru
        _
      // Predicated region
      $region33: #{block_forward_pallas.1} parent=11 // pred_check
        %p287 = pneg %p168
      $region34: #{block_forward_pallas.1} parent=11 // pred_check_branch
        %289 = sbr.rel (%p287) target = $region36
      $region35: #{block_forward_pallas.1} parent=11 // pred_region
        _
      $region36: #{block_forward_pallas.1} parent=11 // pred_fallthru
        _
      // Predicated region
      $region37: #{block_forward_pallas.1} parent=11 // pred_check
        %p290 = pneg %p189
      $region38: #{block_forward_pallas.1} parent=11 // pred_check_branch
        %292 = sbr.rel (%p290) target = $region40
      $region39: #{block_forward_pallas.1} parent=11 // pred_region
        _
      $region40: #{block_forward_pallas.1} parent=11 // pred_fallthru
        _
      // Predicated region
      $region41: #{block_forward_pallas.1} parent=11 // pred_check
        %p293 = pneg %p210
      $region42: #{block_forward_pallas.1} parent=11 // pred_check_branch
        %295 = sbr.rel (%p293) target = $region44
      $region43: #{block_forward_pallas.1} parent=11 // pred_region
        _
      $region44: #{block_forward_pallas.1} parent=11 // pred_fallthru
        _
      // Predicated region
      $region45: #{block_forward_pallas.1} parent=11 // pred_check
        %p296 = pneg %p231
      $region46: #{block_forward_pallas.1} parent=11 // pred_check_branch
        %298 = sbr.rel (%p296) target = $region48
      $region47: #{block_forward_pallas.1} parent=11 // pred_region
        _
      $region48: #{block_forward_pallas.1} parent=11 // pred_fallthru
        _
    $region12: #{block_forward_pallas.1} parent=5 // pred_fallthru
      _
    %p299 = scmp.lt.s32.totalorder %s16, 2
    // Predicated region
    $region49: #{block_forward_pallas.1} parent=5 // pred_check
      %p300 = pneg %p299
    $region50: #{block_forward_pallas.1} parent=5 // pred_check_branch
      %302 = sbr.rel (%p300) target = $region52
    $region51: #{block_forward_pallas.1} parent=5 // pred_region
      // Predicated region
      $region53: #{block_forward_pallas.1} parent=51 // pred_check
        %p303 = pneg %p36
      $region54: #{block_forward_pallas.1} parent=51 // pred_check_branch
        %305 = sbr.rel (%p303) target = $region56
      $region55: #{block_forward_pallas.1} parent=51 // pred_region
        %s306 = smul.u32 16, %s16
        %p307 = scmp.lt.s32.totalorder %s306, 31
        %s308 = scalar_select %p307, %s306, 31
        %s309 = smul.addr %s308, 8
        %s310 = scalar_lea.vmem %s0, %s309
        %s311 = smul.u32 16, %s16
      $region56: #{block_forward_pallas.1} parent=51 // pred_fallthru
        _
    $region52: #{block_forward_pallas.1} parent=5 // pred_fallthru
      _
    %p312 = scmp.le.s32.totalorder 1, %s16
    %p313 = scmp.lt.s32.totalorder %s16, 3
    %p314 = pnand %p312, %p313
    %p315 = pneg %p314
    // Predicated region
    $region57: #{block_forward_pallas.1} parent=5 // pred_check
      _
    $region58: #{block_forward_pallas.1} parent=5 // pred_check_branch
      %317 = sbr.rel (%p314) target = $region60
    $region59: #{block_forward_pallas.1} parent=5 // pred_region
      %s318 = ssub.s32 %s16, 1
      %s319 = smul.u32 16, %s21
      %p320 = scmp.lt.s32.totalorder %s319, 31
      %s321 = scalar_select %p320, %s319, 31
      %s322 = smul.addr %s321, 8
      %s323 = scalar_lea.vmem %s0, %s322
      %p324 = pneg %p42
      %p325 = pneg %p39
      %p326 = pneg %p63
      %p327 = pneg %p60
      %p328 = pneg %p84
      %p329 = pneg %p81
      %p330 = pneg %p105
      %p331 = pneg %p102
      %p332 = pneg %p126
      %p333 = pneg %p123
      %p334 = pneg %p147
      %p335 = pneg %p144
      %p336 = pneg %p168
      %p337 = pneg %p165
      %p338 = pneg %p189
      %p339 = pneg %p186
      %p340 = pneg %p210
      %p341 = pneg %p207
      %p342 = pneg %p231
      %p343 = pneg %p228
      %p344 = pneg %p257
      %p345 = pneg %p254
      %s346 = smul.u32 4, %s21
      %p347 = scmp.lt.s32.totalorder %s346, 7
      %s348 = scalar_select %p347, %s346, 7
      %s349 = smul.addr %s348, 8
      %s350 = scalar_lea.vmem %s10, %s349
      %s351 = smul.u32 16, %s21
      %p352 = scmp.lt.s32.totalorder %s351, 31
      %s353 = scalar_select %p352, %s351, 31
      %s354 = smul.addr %s353, 8
      %s355 = scalar_lea.vmem %s0, %s354
      %s356 = smul.u32 16, %s21
      %s357 = smul.u32 4, %s21
      %p358 = scmp.lt.s32.totalorder %s357, 7
      %s359 = scalar_select %p358, %s357, 7
      %s360 = smul.addr %s359, 8
      %s361 = scalar_lea.vmem %s10, %s360
      %s362 = smul.u32 4, %s21
      %v364 = vld [vmem:[%s355] sm:$0xff]
      %v365 = vld [vmem:[%s355 + $0x8] sm:$0xff]
      %v366 = vld [vmem:[%s355 + $0x10] sm:$0xff]
      %v367 = vld [vmem:[%s355 + $0x18] sm:$0xff]
      %v368 = vld [vmem:[%s355 + $0x20] sm:$0xff]
      %v369 = vld [vmem:[%s355 + $0x28] sm:$0xff]
      %v370 = vld [vmem:[%s355 + $0x30] sm:$0xff]
      %v371 = vld [vmem:[%s355 + $0x38] sm:$0xff]
      %v372 = vld [vmem:[%s355 + $0x40] sm:$0xff]
      %v373 = vld [vmem:[%s355 + $0x48] sm:$0xff]
      %v374 = vld [vmem:[%s355 + $0x50] sm:$0xff]
      %v375 = vld [vmem:[%s355 + $0x58] sm:$0xff]
      %v376 = vld [vmem:[%s355 + $0x60] sm:$0xff]
      %v377 = vld [vmem:[%s355 + $0x68] sm:$0xff]
      %v378 = vld [vmem:[%s355 + $0x70] sm:$0xff]
      %v379 = vld [vmem:[%s355 + $0x78] sm:$0xff]
      %v380 = vlaneseq
      %v381 = vshrl.u32 %v380, 7
      %v382 = vadd.s32 %v381, 8
      %v383 = vadd.s32 %v381, 16
      %v384 = vadd.s32 %v381, 24
      %v385 = vadd.s32 %v381, 32
      %v386 = vadd.s32 %v381, 40
      %v387 = vadd.s32 %v381, 48
      %v388 = vadd.s32 %v381, 56
      %v389 = vadd.s32 %v381, 64
      %v390 = vadd.s32 %v381, 72
      %v391 = vadd.s32 %v381, 80
      %v392 = vadd.s32 %v381, 88
      %v393 = vadd.s32 %v381, 96
      %v394 = vadd.s32 %v381, 104
      %v395 = vadd.s32 %v381, 112
      %v396 = vadd.s32 %v381, 120
      %vm397 = vcmp.lt.s32.totalorder %v381, 0
      %v398 = vsub.s32 0, %v381
      %v399 = vsel %vm397, %v398, %v381
      %v400 = vshrl.u32 %v399, 4
      %v401 = vand.u32 %v399, 15
      %v402 = vsub.s32 0, %v401
      %v403 = vsel %vm397, %v402, %v401
      %vm404 = vcmp.lt.s32.totalorder %v382, 0
      %v405 = vsub.s32 0, %v382
      %v406 = vsel %vm404, %v405, %v382
      %v407 = vshrl.u32 %v406, 4
      %v408 = vand.u32 %v406, 15
      %v409 = vsub.s32 0, %v408
      %v410 = vsel %vm404, %v409, %v408
      %vm411 = vcmp.lt.s32.totalorder %v383, 0
      %v412 = vsub.s32 0, %v383
      %v413 = vsel %vm411, %v412, %v383
      %v414 = vshrl.u32 %v413, 4
      %v415 = vand.u32 %v413, 15
      %v416 = vsub.s32 0, %v415
      %v417 = vsel %vm411, %v416, %v415
      %vm418 = vcmp.lt.s32.totalorder %v384, 0
      %v419 = vsub.s32 0, %v384
      %v420 = vsel %vm418, %v419, %v384
      %v421 = vshrl.u32 %v420, 4
      %v422 = vand.u32 %v420, 15
      %v423 = vsub.s32 0, %v422
      %v424 = vsel %vm418, %v423, %v422
      %vm425 = vcmp.lt.s32.totalorder %v385, 0
      %v426 = vsub.s32 0, %v385
      %v427 = vsel %vm425, %v426, %v385
      %v428 = vshrl.u32 %v427, 4
      %v429 = vand.u32 %v427, 15
      %v430 = vsub.s32 0, %v429
      %v431 = vsel %vm425, %v430, %v429
      %vm432 = vcmp.lt.s32.totalorder %v386, 0
      %v433 = vsub.s32 0, %v386
      %v434 = vsel %vm432, %v433, %v386
      %v435 = vshrl.u32 %v434, 4
      %v436 = vand.u32 %v434, 15
      %v437 = vsub.s32 0, %v436
      %v438 = vsel %vm432, %v437, %v436
      %vm439 = vcmp.lt.s32.totalorder %v387, 0
      %v440 = vsub.s32 0, %v387
      %v441 = vsel %vm439, %v440, %v387
      %v442 = vshrl.u32 %v441, 4
      %v443 = vand.u32 %v441, 15
      %v444 = vsub.s32 0, %v443
      %v445 = vsel %vm439, %v444, %v443
      %vm446 = vcmp.lt.s32.totalorder %v388, 0
      %v447 = vsub.s32 0, %v388
      %v448 = vsel %vm446, %v447, %v388
      %v449 = vshrl.u32 %v448, 4
      %v450 = vand.u32 %v448, 15
      %v451 = vsub.s32 0, %v450
      %v452 = vsel %vm446, %v451, %v450
      %vm453 = vcmp.lt.s32.totalorder %v389, 0
      %v454 = vsub.s32 0, %v389
      %v455 = vsel %vm453, %v454, %v389
      %v456 = vshrl.u32 %v455, 4
      %v457 = vand.u32 %v455, 15
      %v458 = vsub.s32 0, %v457
      %v459 = vsel %vm453, %v458, %v457
      %vm460 = vcmp.lt.s32.totalorder %v390, 0
      %v461 = vsub.s32 0, %v390
      %v462 = vsel %vm460, %v461, %v390
      %v463 = vshrl.u32 %v462, 4
      %v464 = vand.u32 %v462, 15
      %v465 = vsub.s32 0, %v464
      %v466 = vsel %vm460, %v465, %v464
      %vm467 = vcmp.lt.s32.totalorder %v391, 0
      %v468 = vsub.s32 0, %v391
      %v469 = vsel %vm467, %v468, %v391
      %v470 = vshrl.u32 %v469, 4
      %v471 = vand.u32 %v469, 15
      %v472 = vsub.s32 0, %v471
      %v473 = vsel %vm467, %v472, %v471
      %vm474 = vcmp.lt.s32.totalorder %v392, 0
      %v475 = vsub.s32 0, %v392
      %v476 = vsel %vm474, %v475, %v392
      %v477 = vshrl.u32 %v476, 4
      %v478 = vand.u32 %v476, 15
      %v479 = vsub.s32 0, %v478
      %v480 = vsel %vm474, %v479, %v478
      %vm481 = vcmp.lt.s32.totalorder %v393, 0
      %v482 = vsub.s32 0, %v393
      %v483 = vsel %vm481, %v482, %v393
      %v484 = vshrl.u32 %v483, 4
      %v485 = vand.u32 %v483, 15
      %v486 = vsub.s32 0, %v485
      %v487 = vsel %vm481, %v486, %v485
      %vm488 = vcmp.lt.s32.totalorder %v394, 0
      %v489 = vsub.s32 0, %v394
      %v490 = vsel %vm488, %v489, %v394
      %v491 = vshrl.u32 %v490, 4
      %v492 = vand.u32 %v490, 15
      %v493 = vsub.s32 0, %v492
      %v494 = vsel %vm488, %v493, %v492
      %vm495 = vcmp.lt.s32.totalorder %v395, 0
      %v496 = vsub.s32 0, %v395
      %v497 = vsel %vm495, %v496, %v395
      %v498 = vshrl.u32 %v497, 4
      %v499 = vand.u32 %v497, 15
      %v500 = vsub.s32 0, %v499
      %v501 = vsel %vm495, %v500, %v499
      %vm502 = vcmp.lt.s32.totalorder %v396, 0
      %v503 = vsub.s32 0, %v396
      %v504 = vsel %vm502, %v503, %v396
      %v505 = vshrl.u32 %v504, 4
      %v506 = vand.u32 %v504, 15
      %v507 = vsub.s32 0, %v506
      %v508 = vsel %vm502, %v507, %v506
      %vm509 = vcmp.ne.s32.totalorder %v403, 0
      %vm510 = vcmp.ne.s32.totalorder %v410, 0
      %vm511 = vcmp.ne.s32.totalorder %v417, 0
      %vm512 = vcmp.ne.s32.totalorder %v424, 0
      %vm513 = vcmp.ne.s32.totalorder %v431, 0
      %vm514 = vcmp.ne.s32.totalorder %v438, 0
      %vm515 = vcmp.ne.s32.totalorder %v445, 0
      %vm516 = vcmp.ne.s32.totalorder %v452, 0
      %vm517 = vcmp.ne.s32.totalorder %v459, 0
      %vm518 = vcmp.ne.s32.totalorder %v466, 0
      %vm519 = vcmp.ne.s32.totalorder %v473, 0
      %vm520 = vcmp.ne.s32.totalorder %v480, 0
      %vm521 = vcmp.ne.s32.totalorder %v487, 0
      %vm522 = vcmp.ne.s32.totalorder %v494, 0
      %vm523 = vcmp.ne.s32.totalorder %v501, 0
      %vm524 = vcmp.ne.s32.totalorder %v508, 0
      %vm525 = vcmp.lt.s32.totalorder %v403, 0
      %vm526 = vcmp.lt.s32.totalorder %v410, 0
      %vm527 = vcmp.lt.s32.totalorder %v417, 0
      %vm528 = vcmp.lt.s32.totalorder %v424, 0
      %vm529 = vcmp.lt.s32.totalorder %v431, 0
      %vm530 = vcmp.lt.s32.totalorder %v438, 0
      %vm531 = vcmp.lt.s32.totalorder %v445, 0
      %vm532 = vcmp.lt.s32.totalorder %v452, 0
      %vm533 = vcmp.lt.s32.totalorder %v459, 0
      %vm534 = vcmp.lt.s32.totalorder %v466, 0
      %vm535 = vcmp.lt.s32.totalorder %v473, 0
      %vm536 = vcmp.lt.s32.totalorder %v480, 0
      %vm537 = vcmp.lt.s32.totalorder %v487, 0
      %vm538 = vcmp.lt.s32.totalorder %v494, 0
      %vm539 = vcmp.lt.s32.totalorder %v501, 0
      %vm540 = vcmp.lt.s32.totalorder %v508, 0
      %vm541 = vmand %vm525, %vm509
      %vm542 = vmand %vm526, %vm510
      %vm543 = vmand %vm527, %vm511
      %vm544 = vmand %vm528, %vm512
      %vm545 = vmand %vm529, %vm513
      %vm546 = vmand %vm530, %vm514
      %vm547 = vmand %vm531, %vm515
      %vm548 = vmand %vm532, %vm516
      %vm549 = vmand %vm533, %vm517
      %vm550 = vmand %vm534, %vm518
      %vm551 = vmand %vm535, %vm519
      %vm552 = vmand %vm536, %vm520
      %vm553 = vmand %vm537, %vm521
      %vm554 = vmand %vm538, %vm522
      %vm555 = vmand %vm539, %vm523
      %vm556 = vmand %vm540, %vm524
      %v557 = vadd.s32 %v403, 16
      %v558 = vadd.s32 %v410, 16
      %v559 = vadd.s32 %v417, 16
      %v560 = vadd.s32 %v424, 16
      %v561 = vadd.s32 %v431, 16
      %v562 = vadd.s32 %v438, 16
      %v563 = vadd.s32 %v445, 16
      %v564 = vadd.s32 %v452, 16
      %v565 = vadd.s32 %v459, 16
      %v566 = vadd.s32 %v466, 16
      %v567 = vadd.s32 %v473, 16
      %v568 = vadd.s32 %v480, 16
      %v569 = vadd.s32 %v487, 16
      %v570 = vadd.s32 %v494, 16
      %v571 = vadd.s32 %v501, 16
      %v572 = vadd.s32 %v508, 16
      %v573 = vsel %vm541, %v557, %v403
      %v574 = vsel %vm542, %v558, %v410
      %v575 = vsel %vm543, %v559, %v417
      %v576 = vsel %vm544, %v560, %v424
      %v577 = vsel %vm545, %v561, %v431
      %v578 = vsel %vm546, %v562, %v438
      %v579 = vsel %vm547, %v563, %v445
      %v580 = vsel %vm548, %v564, %v452
      %v581 = vsel %vm549, %v565, %v459
      %v582 = vsel %vm550, %v566, %v466
      %v583 = vsel %vm551, %v567, %v473
      %v584 = vsel %vm552, %v568, %v480
      %v585 = vsel %vm553, %v569, %v487
      %v586 = vsel %vm554, %v570, %v494
      %v587 = vsel %vm555, %v571, %v501
      %v588 = vsel %vm556, %v572, %v508
      %vm589 = vcmp.eq.s32.totalorder %v573, 0
      %vm590 = vcmp.eq.s32.totalorder %v574, 0
      %vm591 = vcmp.eq.s32.totalorder %v575, 0
      %vm592 = vcmp.eq.s32.totalorder %v576, 0
      %vm593 = vcmp.eq.s32.totalorder %v577, 0
      %vm594 = vcmp.eq.s32.totalorder %v578, 0
      %vm595 = vcmp.eq.s32.totalorder %v579, 0
      %vm596 = vcmp.eq.s32.totalorder %v580, 0
      %vm597 = vcmp.eq.s32.totalorder %v581, 0
      %vm598 = vcmp.eq.s32.totalorder %v582, 0
      %vm599 = vcmp.eq.s32.totalorder %v583, 0
      %vm600 = vcmp.eq.s32.totalorder %v584, 0
      %vm601 = vcmp.eq.s32.totalorder %v585, 0
      %vm602 = vcmp.eq.s32.totalorder %v586, 0
      %vm603 = vcmp.eq.s32.totalorder %v587, 0
      %vm604 = vcmp.eq.s32.totalorder %v588, 0
      %vm605 = vcmp.eq.s32.totalorder %v573, 15
      %vm606 = vcmp.eq.s32.totalorder %v574, 15
      %vm607 = vcmp.eq.s32.totalorder %v575, 15
      %vm608 = vcmp.eq.s32.totalorder %v576, 15
      %vm609 = vcmp.eq.s32.totalorder %v577, 15
      %vm610 = vcmp.eq.s32.totalorder %v578, 15
      %vm611 = vcmp.eq.s32.totalorder %v579, 15
      %vm612 = vcmp.eq.s32.totalorder %v580, 15
      %vm613 = vcmp.eq.s32.totalorder %v581, 15
      %vm614 = vcmp.eq.s32.totalorder %v582, 15
      %vm615 = vcmp.eq.s32.totalorder %v583, 15
      %vm616 = vcmp.eq.s32.totalorder %v584, 15
      %vm617 = vcmp.eq.s32.totalorder %v585, 15
      %vm618 = vcmp.eq.s32.totalorder %v586, 15
      %vm619 = vcmp.eq.s32.totalorder %v587, 15
      %vm620 = vcmp.eq.s32.totalorder %v588, 15
      %v621 = vpack.c.bf16 %v365, %v364
      %v622 = vpack.c.bf16 %v367, %v366
      %v623 = vpack.c.bf16 %v369, %v368
      %v624 = vpack.c.bf16 %v371, %v370
      %v625 = vpack.c.bf16 %v373, %v372
      %v626 = vpack.c.bf16 %v375, %v374
      %v627 = vpack.c.bf16 %v377, %v376
      %v628 = vpack.c.bf16 %v379, %v378
      %v629 = vld [vmem:[%s1] sm:$0xff]
      %v630 = vld [vmem:[%s1 + $0x8] sm:$0xff]
      %v631 = vld [vmem:[%s1 + $0x10] sm:$0xff]
      %v632 = vld [vmem:[%s1 + $0x18] sm:$0xff]
      %v633 = vld [vmem:[%s1 + $0x20] sm:$0xff]
      %v634 = vld [vmem:[%s1 + $0x28] sm:$0xff]
      %v635 = vld [vmem:[%s1 + $0x30] sm:$0xff]
      %v636 = vld [vmem:[%s1 + $0x38] sm:$0xff]
      %v645 = vunpack.c.l.b16 %v629
      %v646 = vunpack.c.h.b16 %v629
      %v647 = vunpack.c.l.b16 %v630
      %v648 = vunpack.c.h.b16 %v630
      %v649 = vunpack.c.l.b16 %v631
      %v650 = vunpack.c.h.b16 %v631
      %v651 = vunpack.c.l.b16 %v632
      %v652 = vunpack.c.h.b16 %v632
      %v653 = vunpack.c.l.b16 %v633
      %v654 = vunpack.c.h.b16 %v633
      %v655 = vunpack.c.l.b16 %v634
      %v656 = vunpack.c.h.b16 %v634
      %v657 = vunpack.c.l.b16 %v635
      %v658 = vunpack.c.h.b16 %v635
      %v659 = vunpack.c.l.b16 %v636
      %v660 = vunpack.c.h.b16 %v636
      %v661 = vpack.c.b16 %v647, %v645
      %v662 = vpack.c.b16 %v648, %v646
      %v663 = vpack.c.b16 %v651, %v649
      %v664 = vpack.c.b16 %v652, %v650
      %v665 = vpack.c.b16 %v655, %v653
      %v666 = vpack.c.b16 %v656, %v654
      %v667 = vpack.c.b16 %v659, %v657
      %v668 = vpack.c.b16 %v660, %v658
      %vm677 = vcmask 523264
      %v679 = vsel %vm677, %v621, 0
      %v682 = vsel %vm677, %v622, 0
      %v685 = vsel %vm677, %v623, 0
      %v688 = vsel %vm677, %v624, 0
      %v691 = vsel %vm677, %v625, 0
      %v694 = vsel %vm677, %v626, 0
      %v697 = vsel %vm677, %v627, 0
      %v700 = vsel %vm677, %v628, 0
      %702 = vmatpush.bf16.msra.mxu0 0
      %703 = vmatpush.bf16.msra.mxu0 0
      %704 = vmatpush.bf16.msra.mxu0 0
      %705 = vmatpush.bf16.msra.mxu0 0
      %706 = vmatpush.bf16.msra.mxu0 %v667
      %707 = vmatpush.bf16.msra.mxu0 %v665
      %708 = vmatpush.bf16.msra.mxu0 %v663
      %709 = vmatpush.bf16.msra.mxu0 %v661
      %710 = vmatmul.bf16.gmra.mxu0 %v679
      %v711 = vpop.f32.mrf.mxu0
      %v712 = vadd.f32 0.0, %v711
      %v713 = vpop.f32.mrf.mxu0
      %v714 = vadd.f32 0.0, %v713
      %715 = vmatmul.bf16.gmra.mxu0 %v682
      %v716 = vpop.f32.mrf.mxu0
      %v717 = vadd.f32 0.0, %v716
      %v718 = vpop.f32.mrf.mxu0
      %v719 = vadd.f32 0.0, %v718
      %720 = vmatmul.bf16.gmra.mxu0 %v685
      %v721 = vpop.f32.mrf.mxu0
      %v722 = vadd.f32 0.0, %v721
      %v723 = vpop.f32.mrf.mxu0
      %v724 = vadd.f32 0.0, %v723
      %725 = vmatmul.bf16.gmra.mxu0 %v688
      %v726 = vpop.f32.mrf.mxu0
      %v727 = vadd.f32 0.0, %v726
      %v728 = vpop.f32.mrf.mxu0
      %v729 = vadd.f32 0.0, %v728
      %730 = vmatmul.bf16.gmra.mxu0 %v691
      %v731 = vpop.f32.mrf.mxu0
      %v732 = vadd.f32 0.0, %v731
      %v733 = vpop.f32.mrf.mxu0
      %v734 = vadd.f32 0.0, %v733
      %735 = vmatmul.bf16.gmra.mxu0 %v694
      %v736 = vpop.f32.mrf.mxu0
      %v737 = vadd.f32 0.0, %v736
      %v738 = vpop.f32.mrf.mxu0
      %v739 = vadd.f32 0.0, %v738
      %740 = vmatmul.bf16.gmra.mxu0 %v697
      %v741 = vpop.f32.mrf.mxu0
      %v742 = vadd.f32 0.0, %v741
      %v743 = vpop.f32.mrf.mxu0
      %v744 = vadd.f32 0.0, %v743
      %745 = vmatmul.bf16.gmra.mxu0 %v700
      %v746 = vpop.f32.mrf.mxu0
      %v747 = vadd.f32 0.0, %v746
      %v748 = vpop.f32.mrf.mxu0
      %v749 = vadd.f32 0.0, %v748
      %750 = vdwg.mxu0
      %751 = vmatpush.bf16.msra.mxu0 0
      %752 = vmatpush.bf16.msra.mxu0 0
      %753 = vmatpush.bf16.msra.mxu0 0
      %754 = vmatpush.bf16.msra.mxu0 0
      %755 = vmatpush.bf16.msra.mxu0 %v668
      %756 = vmatpush.bf16.msra.mxu0 %v666
      %757 = vmatpush.bf16.msra.mxu0 %v664
      %758 = vmatpush.bf16.msra.mxu0 %v662
      %759 = vmatmul.bf16.gmra.mxu0 %v679
      %v760 = vpop.f32.mrf.mxu0
      %v761 = vadd.f32 0.0, %v760
      %v762 = vpop.f32.mrf.mxu0
      %v763 = vadd.f32 0.0, %v762
      %764 = vmatmul.bf16.gmra.mxu0 %v682
      %v765 = vpop.f32.mrf.mxu0
      %v766 = vadd.f32 0.0, %v765
      %v767 = vpop.f32.mrf.mxu0
      %v768 = vadd.f32 0.0, %v767
      %769 = vmatmul.bf16.gmra.mxu0 %v685
      %v770 = vpop.f32.mrf.mxu0
      %v771 = vadd.f32 0.0, %v770
      %v772 = vpop.f32.mrf.mxu0
      %v773 = vadd.f32 0.0, %v772
      %774 = vmatmul.bf16.gmra.mxu0 %v688
      %v775 = vpop.f32.mrf.mxu0
      %v776 = vadd.f32 0.0, %v775
      %v777 = vpop.f32.mrf.mxu0
      %v778 = vadd.f32 0.0, %v777
      %779 = vmatmul.bf16.gmra.mxu0 %v691
      %v780 = vpop.f32.mrf.mxu0
      %v781 = vadd.f32 0.0, %v780
      %v782 = vpop.f32.mrf.mxu0
      %v783 = vadd.f32 0.0, %v782
      %784 = vmatmul.bf16.gmra.mxu0 %v694
      %v785 = vpop.f32.mrf.mxu0
      %v786 = vadd.f32 0.0, %v785
      %v787 = vpop.f32.mrf.mxu0
      %v788 = vadd.f32 0.0, %v787
      %789 = vmatmul.bf16.gmra.mxu0 %v697
      %v790 = vpop.f32.mrf.mxu0
      %v791 = vadd.f32 0.0, %v790
      %v792 = vpop.f32.mrf.mxu0
      %v793 = vadd.f32 0.0, %v792
      %794 = vmatmul.bf16.gmra.mxu0 %v700
      %v795 = vpop.f32.mrf.mxu0
      %v796 = vadd.f32 0.0, %v795
      %v797 = vpop.f32.mrf.mxu0
      %v798 = vadd.f32 0.0, %v797
      %799 = vdwg.mxu0
      %v800 = vrot.slane %v364, 7
      %v801 = vrot.slane %v365, 7
      %v802 = vrot.slane %v366, 7
      %v803 = vrot.slane %v367, 7
      %v804 = vrot.slane %v368, 7
      %v805 = vrot.slane %v369, 7
      %v806 = vrot.slane %v370, 7
      %v807 = vrot.slane %v371, 7
      %v808 = vrot.slane %v372, 7
      %v809 = vrot.slane %v373, 7
      %v810 = vrot.slane %v374, 7
      %v811 = vrot.slane %v375, 7
      %v812 = vrot.slane %v376, 7
      %v813 = vrot.slane %v377, 7
      %v814 = vrot.slane %v378, 7
      %v815 = vrot.slane %v379, 7
      %vm816 = vcmp.lt.s32.totalorder %v381, 1
      %v817 = vsel %vm816, %v814, %v815
      %v818 = vsel %vm816, %v813, %v814
      %v819 = vsel %vm816, %v812, %v813
      %v820 = vsel %vm816, %v811, %v812
      %v821 = vsel %vm816, %v810, %v811
      %v822 = vsel %vm816, %v809, %v810
      %v823 = vsel %vm816, %v808, %v809
      %v824 = vsel %vm816, %v807, %v808
      %v825 = vsel %vm816, %v806, %v807
      %v826 = vsel %vm816, %v805, %v806
      %v827 = vsel %vm816, %v804, %v805
      %v828 = vsel %vm816, %v803, %v804
      %v829 = vsel %vm816, %v802, %v803
      %v830 = vsel %vm816, %v801, %v802
      %v831 = vsel %vm816, %v800, %v801
      %v832 = vsel %vm816, %v815, %v800
      %v833 = vsel %vm589, 1, 0
      %v834 = vsel %vm590, 1, 0
      %v835 = vsel %vm591, 1, 0
      %v836 = vsel %vm592, 1, 0
      %v837 = vsel %vm593, 1, 0
      %v838 = vsel %vm594, 1, 0
      %v839 = vsel %vm595, 1, 0
      %v840 = vsel %vm596, 1, 0
      %v841 = vsel %vm597, 1, 0
      %v842 = vsel %vm598, 1, 0
      %v843 = vsel %vm599, 1, 0
      %v844 = vsel %vm600, 1, 0
      %v845 = vsel %vm601, 1, 0
      %v846 = vsel %vm602, 1, 0
      %v847 = vsel %vm603, 1, 0
      %v848 = vsel %vm604, 1, 0
      %vm849 = vcmp.eq.s32.totalorder %v833, 1
      %vm850 = vcmp.eq.s32.totalorder %v834, 1
      %vm851 = vcmp.eq.s32.totalorder %v835, 1
      %vm852 = vcmp.eq.s32.totalorder %v836, 1
      %vm853 = vcmp.eq.s32.totalorder %v837, 1
      %vm854 = vcmp.eq.s32.totalorder %v838, 1
      %vm855 = vcmp.eq.s32.totalorder %v839, 1
      %vm856 = vcmp.eq.s32.totalorder %v840, 1
      %vm857 = vcmp.eq.s32.totalorder %v841, 1
      %vm858 = vcmp.eq.s32.totalorder %v842, 1
      %vm859 = vcmp.eq.s32.totalorder %v843, 1
      %vm860 = vcmp.eq.s32.totalorder %v844, 1
      %vm861 = vcmp.eq.s32.totalorder %v845, 1
      %vm862 = vcmp.eq.s32.totalorder %v846, 1
      %vm863 = vcmp.eq.s32.totalorder %v847, 1
      %vm864 = vcmp.eq.s32.totalorder %v848, 1
      %v865 = vsel %vm849, 0.0, %v832
      %v866 = vsel %vm850, 0.0, %v831
      %v867 = vsel %vm851, 0.0, %v830
      %v868 = vsel %vm852, 0.0, %v829
      %v869 = vsel %vm853, 0.0, %v828
      %v870 = vsel %vm854, 0.0, %v827
      %v871 = vsel %vm855, 0.0, %v826
      %v872 = vsel %vm856, 0.0, %v825
      %v873 = vsel %vm857, 0.0, %v824
      %v874 = vsel %vm858, 0.0, %v823
      %v875 = vsel %vm859, 0.0, %v822
      %v876 = vsel %vm860, 0.0, %v821
      %v877 = vsel %vm861, 0.0, %v820
      %v878 = vsel %vm862, 0.0, %v819
      %v879 = vsel %vm863, 0.0, %v818
      %v880 = vsel %vm864, 0.0, %v817
      %v881 = vpack.c.bf16 %v866, %v865
      %v882 = vpack.c.bf16 %v868, %v867
      %v883 = vpack.c.bf16 %v870, %v869
      %v884 = vpack.c.bf16 %v872, %v871
      %v885 = vpack.c.bf16 %v874, %v873
      %v886 = vpack.c.bf16 %v876, %v875
      %v887 = vpack.c.bf16 %v878, %v877
      %v888 = vpack.c.bf16 %v880, %v879
      %v889 = vld [vmem:[%s2] sm:$0xf]
      %v890 = vld [vmem:[%s2 + $0x4] sm:$0xf]
      %v891 = vld [vmem:[%s2 + $0x8] sm:$0xf]
      %v892 = vld [vmem:[%s2 + $0xc] sm:$0xf]
      %v893 = vld [vmem:[%s2 + $0x10] sm:$0xf]
      %v894 = vld [vmem:[%s2 + $0x14] sm:$0xf]
      %v895 = vld [vmem:[%s2 + $0x18] sm:$0xf]
      %v896 = vld [vmem:[%s2 + $0x1c] sm:$0xf]
      %v905 = vunpack.c.l.b16 %v889
      %v906 = vunpack.c.l.b16 %v890
      %v907 = vunpack.c.l.b16 %v891
      %v908 = vunpack.c.l.b16 %v892
      %v909 = vunpack.c.l.b16 %v893
      %v910 = vunpack.c.l.b16 %v894
      %v911 = vunpack.c.l.b16 %v895
      %v912 = vunpack.c.l.b16 %v896
      %v913 = vpack.c.b16 %v906, %v905
      %v914 = vpack.c.b16 %v908, %v907
      %v915 = vpack.c.b16 %v910, %v909
      %v916 = vpack.c.b16 %v912, %v911
      %v922 = vsel %vm677, %v881, 0
      %v925 = vsel %vm677, %v882, 0
      %v928 = vsel %vm677, %v883, 0
      %v931 = vsel %vm677, %v884, 0
      %v934 = vsel %vm677, %v885, 0
      %v937 = vsel %vm677, %v886, 0
      %v940 = vsel %vm677, %v887, 0
      %v943 = vsel %vm677, %v888, 0
      %945 = vmatpush.bf16.msra.mxu0 0
      %946 = vmatpush.bf16.msra.mxu0 0
      %947 = vmatpush.bf16.msra.mxu0 0
      %948 = vmatpush.bf16.msra.mxu0 0
      %949 = vmatpush.bf16.msra.mxu0 %v916
      %950 = vmatpush.bf16.msra.mxu0 %v915
      %951 = vmatpush.bf16.msra.mxu0 %v914
      %952 = vmatpush.bf16.msra.mxu0 %v913
      %953 = vmatmul.bf16.gmra.mxu0 %v922
      %v954 = vpop.f32.mrf.mxu0
      %v955 = vadd.f32 0.0, %v954
      %v956 = vpop.f32.mrf.mxu0
      %v957 = vadd.f32 0.0, %v956
      %958 = vmatmul.bf16.gmra.mxu0 %v925
      %v959 = vpop.f32.mrf.mxu0
      %v960 = vadd.f32 0.0, %v959
      %v961 = vpop.f32.mrf.mxu0
      %v962 = vadd.f32 0.0, %v961
      %963 = vmatmul.bf16.gmra.mxu0 %v928
      %v964 = vpop.f32.mrf.mxu0
      %v965 = vadd.f32 0.0, %v964
      %v966 = vpop.f32.mrf.mxu0
      %v967 = vadd.f32 0.0, %v966
      %968 = vmatmul.bf16.gmra.mxu0 %v931
      %v969 = vpop.f32.mrf.mxu0
      %v970 = vadd.f32 0.0, %v969
      %v971 = vpop.f32.mrf.mxu0
      %v972 = vadd.f32 0.0, %v971
      %973 = vmatmul.bf16.gmra.mxu0 %v934
      %v974 = vpop.f32.mrf.mxu0
      %v975 = vadd.f32 0.0, %v974
      %v976 = vpop.f32.mrf.mxu0
      %v977 = vadd.f32 0.0, %v976
      %978 = vmatmul.bf16.gmra.mxu0 %v937
      %v979 = vpop.f32.mrf.mxu0
      %v980 = vadd.f32 0.0, %v979
      %v981 = vpop.f32.mrf.mxu0
      %v982 = vadd.f32 0.0, %v981
      %983 = vmatmul.bf16.gmra.mxu0 %v940
      %v984 = vpop.f32.mrf.mxu0
      %v985 = vadd.f32 0.0, %v984
      %v986 = vpop.f32.mrf.mxu0
      %v987 = vadd.f32 0.0, %v986
      %988 = vmatmul.bf16.gmra.mxu0 %v943
      %v989 = vpop.f32.mrf.mxu0
      %v990 = vadd.f32 0.0, %v989
      %v991 = vpop.f32.mrf.mxu0
      %v992 = vadd.f32 0.0, %v991
      %993 = vdwg.mxu0
      %v994 = vrot.slane %v364, 1
      %v995 = vrot.slane %v365, 1
      %v996 = vrot.slane %v366, 1
      %v997 = vrot.slane %v367, 1
      %v998 = vrot.slane %v368, 1
      %v999 = vrot.slane %v369, 1
      %v1000 = vrot.slane %v370, 1
      %v1001 = vrot.slane %v371, 1
      %v1002 = vrot.slane %v372, 1
      %v1003 = vrot.slane %v373, 1
      %v1004 = vrot.slane %v374, 1
      %v1005 = vrot.slane %v375, 1
      %v1006 = vrot.slane %v376, 1
      %v1007 = vrot.slane %v377, 1
      %v1008 = vrot.slane %v378, 1
      %v1009 = vrot.slane %v379, 1
      %vm1010 = vcmp.lt.s32.totalorder %v381, 7
      %v1011 = vsel %vm1010, %v1008, %v1009
      %v1012 = vsel %vm1010, %v1007, %v1008
      %v1013 = vsel %vm1010, %v1006, %v1007
      %v1014 = vsel %vm1010, %v1005, %v1006
      %v1015 = vsel %vm1010, %v1004, %v1005
      %v1016 = vsel %vm1010, %v1003, %v1004
      %v1017 = vsel %vm1010, %v1002, %v1003
      %v1018 = vsel %vm1010, %v1001, %v1002
      %v1019 = vsel %vm1010, %v1000, %v1001
      %v1020 = vsel %vm1010, %v999, %v1000
      %v1021 = vsel %vm1010, %v998, %v999
      %v1022 = vsel %vm1010, %v997, %v998
      %v1023 = vsel %vm1010, %v996, %v997
      %v1024 = vsel %vm1010, %v995, %v996
      %v1025 = vsel %vm1010, %v994, %v995
      %v1026 = vsel %vm1010, %v1009, %v994
      %v1027 = vsel %vm605, 1, 0
      %v1028 = vsel %vm606, 1, 0
      %v1029 = vsel %vm607, 1, 0
      %v1030 = vsel %vm608, 1, 0
      %v1031 = vsel %vm609, 1, 0
      %v1032 = vsel %vm610, 1, 0
      %v1033 = vsel %vm611, 1, 0
      %v1034 = vsel %vm612, 1, 0
      %v1035 = vsel %vm613, 1, 0
      %v1036 = vsel %vm614, 1, 0
      %v1037 = vsel %vm615, 1, 0
      %v1038 = vsel %vm616, 1, 0
      %v1039 = vsel %vm617, 1, 0
      %v1040 = vsel %vm618, 1, 0
      %v1041 = vsel %vm619, 1, 0
      %v1042 = vsel %vm620, 1, 0
      %vm1043 = vcmp.eq.s32.totalorder %v1027, 1
      %vm1044 = vcmp.eq.s32.totalorder %v1028, 1
      %vm1045 = vcmp.eq.s32.totalorder %v1029, 1
      %vm1046 = vcmp.eq.s32.totalorder %v1030, 1
      %vm1047 = vcmp.eq.s32.totalorder %v1031, 1
      %vm1048 = vcmp.eq.s32.totalorder %v1032, 1
      %vm1049 = vcmp.eq.s32.totalorder %v1033, 1
      %vm1050 = vcmp.eq.s32.totalorder %v1034, 1
      %vm1051 = vcmp.eq.s32.totalorder %v1035, 1
      %vm1052 = vcmp.eq.s32.totalorder %v1036, 1
      %vm1053 = vcmp.eq.s32.totalorder %v1037, 1
      %vm1054 = vcmp.eq.s32.totalorder %v1038, 1
      %vm1055 = vcmp.eq.s32.totalorder %v1039, 1
      %vm1056 = vcmp.eq.s32.totalorder %v1040, 1
      %vm1057 = vcmp.eq.s32.totalorder %v1041, 1
      %vm1058 = vcmp.eq.s32.totalorder %v1042, 1
      %v1059 = vsel %vm1043, 0.0, %v1025
      %v1060 = vsel %vm1044, 0.0, %v1024
      %v1061 = vsel %vm1045, 0.0, %v1023
      %v1062 = vsel %vm1046, 0.0, %v1022
      %v1063 = vsel %vm1047, 0.0, %v1021
      %v1064 = vsel %vm1048, 0.0, %v1020
      %v1065 = vsel %vm1049, 0.0, %v1019
      %v1066 = vsel %vm1050, 0.0, %v1018
      %v1067 = vsel %vm1051, 0.0, %v1017
      %v1068 = vsel %vm1052, 0.0, %v1016
      %v1069 = vsel %vm1053, 0.0, %v1015
      %v1070 = vsel %vm1054, 0.0, %v1014
      %v1071 = vsel %vm1055, 0.0, %v1013
      %v1072 = vsel %vm1056, 0.0, %v1012
      %v1073 = vsel %vm1057, 0.0, %v1011
      %v1074 = vsel %vm1058, 0.0, %v1026
      %v1075 = vpack.c.bf16 %v1060, %v1059
      %v1076 = vpack.c.bf16 %v1062, %v1061
      %v1077 = vpack.c.bf16 %v1064, %v1063
      %v1078 = vpack.c.bf16 %v1066, %v1065
      %v1079 = vpack.c.bf16 %v1068, %v1067
      %v1080 = vpack.c.bf16 %v1070, %v1069
      %v1081 = vpack.c.bf16 %v1072, %v1071
      %v1082 = vpack.c.bf16 %v1074, %v1073
      %s1083 = scalar_lea.vmem %s2, 32
      %v1084 = vld [vmem:[%s1083] sm:$0xf]
      %v1085 = vld [vmem:[%s1083 + $0x4] sm:$0xf]
      %v1086 = vld [vmem:[%s1083 + $0x8] sm:$0xf]
      %v1087 = vld [vmem:[%s1083 + $0xc] sm:$0xf]
      %v1088 = vld [vmem:[%s1083 + $0x10] sm:$0xf]
      %v1089 = vld [vmem:[%s1083 + $0x14] sm:$0xf]
      %v1090 = vld [vmem:[%s1083 + $0x18] sm:$0xf]
      %v1091 = vld [vmem:[%s1083 + $0x1c] sm:$0xf]
      %v1100 = vunpack.c.l.b16 %v1084
      %v1101 = vunpack.c.l.b16 %v1085
      %v1102 = vunpack.c.l.b16 %v1086
      %v1103 = vunpack.c.l.b16 %v1087
      %v1104 = vunpack.c.l.b16 %v1088
      %v1105 = vunpack.c.l.b16 %v1089
      %v1106 = vunpack.c.l.b16 %v1090
      %v1107 = vunpack.c.l.b16 %v1091
      %v1108 = vpack.c.b16 %v1101, %v1100
      %v1109 = vpack.c.b16 %v1103, %v1102
      %v1110 = vpack.c.b16 %v1105, %v1104
      %v1111 = vpack.c.b16 %v1107, %v1106
      %v1117 = vsel %vm677, %v1075, 0
      %v1120 = vsel %vm677, %v1076, 0
      %v1123 = vsel %vm677, %v1077, 0
      %v1126 = vsel %vm677, %v1078, 0
      %v1129 = vsel %vm677, %v1079, 0
      %v1132 = vsel %vm677, %v1080, 0
      %v1135 = vsel %vm677, %v1081, 0
      %v1138 = vsel %vm677, %v1082, 0
      %1140 = vmatpush.bf16.msra.mxu0 0
      %1141 = vmatpush.bf16.msra.mxu0 0
      %1142 = vmatpush.bf16.msra.mxu0 0
      %1143 = vmatpush.bf16.msra.mxu0 0
      %1144 = vmatpush.bf16.msra.mxu0 %v1111
      %1145 = vmatpush.bf16.msra.mxu0 %v1110
      %1146 = vmatpush.bf16.msra.mxu0 %v1109
      %1147 = vmatpush.bf16.msra.mxu0 %v1108
      %1148 = vmatmul.bf16.gmra.mxu0 %v1117
      %v1149 = vpop.f32.mrf.mxu0
      %v1150 = vadd.f32 0.0, %v1149
      %v1151 = vpop.f32.mrf.mxu0
      %v1152 = vadd.f32 0.0, %v1151
      %1153 = vmatmul.bf16.gmra.mxu0 %v1120
      %v1154 = vpop.f32.mrf.mxu0
      %v1155 = vadd.f32 0.0, %v1154
      %v1156 = vpop.f32.mrf.mxu0
      %v1157 = vadd.f32 0.0, %v1156
      %1158 = vmatmul.bf16.gmra.mxu0 %v1123
      %v1159 = vpop.f32.mrf.mxu0
      %v1160 = vadd.f32 0.0, %v1159
      %v1161 = vpop.f32.mrf.mxu0
      %v1162 = vadd.f32 0.0, %v1161
      %1163 = vmatmul.bf16.gmra.mxu0 %v1126
      %v1164 = vpop.f32.mrf.mxu0
      %v1165 = vadd.f32 0.0, %v1164
      %v1166 = vpop.f32.mrf.mxu0
      %v1167 = vadd.f32 0.0, %v1166
      %1168 = vmatmul.bf16.gmra.mxu0 %v1129
      %v1169 = vpop.f32.mrf.mxu0
      %v1170 = vadd.f32 0.0, %v1169
      %v1171 = vpop.f32.mrf.mxu0
      %v1172 = vadd.f32 0.0, %v1171
      %1173 = vmatmul.bf16.gmra.mxu0 %v1132
      %v1174 = vpop.f32.mrf.mxu0
      %v1175 = vadd.f32 0.0, %v1174
      %v1176 = vpop.f32.mrf.mxu0
      %v1177 = vadd.f32 0.0, %v1176
      %1178 = vmatmul.bf16.gmra.mxu0 %v1135
      %v1179 = vpop.f32.mrf.mxu0
      %v1180 = vadd.f32 0.0, %v1179
      %v1181 = vpop.f32.mrf.mxu0
      %v1182 = vadd.f32 0.0, %v1181
      %1183 = vmatmul.bf16.gmra.mxu0 %v1138
      %v1184 = vpop.f32.mrf.mxu0
      %v1185 = vadd.f32 0.0, %v1184
      %v1186 = vpop.f32.mrf.mxu0
      %v1187 = vadd.f32 0.0, %v1186
      %1188 = vdwg.mxu0
      %v1189 = vadd.f32 %v712, %v955
      %v1190 = vadd.f32 %v714, %v957
      %v1191 = vadd.f32 %v717, %v960
      %v1192 = vadd.f32 %v719, %v962
      %v1193 = vadd.f32 %v722, %v965
      %v1194 = vadd.f32 %v724, %v967
      %v1195 = vadd.f32 %v727, %v970
      %v1196 = vadd.f32 %v729, %v972
      %v1197 = vadd.f32 %v732, %v975
      %v1198 = vadd.f32 %v734, %v977
      %v1199 = vadd.f32 %v737, %v980
      %v1200 = vadd.f32 %v739, %v982
      %v1201 = vadd.f32 %v742, %v985
      %v1202 = vadd.f32 %v744, %v987
      %v1203 = vadd.f32 %v747, %v990
      %v1204 = vadd.f32 %v749, %v992
      %v1205 = vadd.f32 %v1189, %v1150
      %v1206 = vadd.f32 %v1190, %v1152
      %v1207 = vadd.f32 %v1191, %v1155
      %v1208 = vadd.f32 %v1192, %v1157
      %v1209 = vadd.f32 %v1193, %v1160
      %v1210 = vadd.f32 %v1194, %v1162
      %v1211 = vadd.f32 %v1195, %v1165
      %v1212 = vadd.f32 %v1196, %v1167
      %v1213 = vadd.f32 %v1197, %v1170
      %v1214 = vadd.f32 %v1198, %v1172
      %v1215 = vadd.f32 %v1199, %v1175
      %v1216 = vadd.f32 %v1200, %v1177
      %v1217 = vadd.f32 %v1201, %v1180
      %v1218 = vadd.f32 %v1202, %v1182
      %v1219 = vadd.f32 %v1203, %v1185
      %v1220 = vadd.f32 %v1204, %v1187
      %v1221 = vld [vmem:[%s3] sm:$0x1]
      %v1223 = vperm.slane %v1221, 0
      %v1225 = vadd.f32 %v1205, %v1223
      %v1226 = vadd.f32 %v1206, %v1223
      %v1227 = vadd.f32 %v1207, %v1223
      %v1228 = vadd.f32 %v1208, %v1223
      %v1229 = vadd.f32 %v1209, %v1223
      %v1230 = vadd.f32 %v1210, %v1223
      %v1231 = vadd.f32 %v1211, %v1223
      %v1232 = vadd.f32 %v1212, %v1223
      %v1233 = vadd.f32 %v1213, %v1223
      %v1234 = vadd.f32 %v1214, %v1223
      %v1235 = vadd.f32 %v1215, %v1223
      %v1236 = vadd.f32 %v1216, %v1223
      %v1237 = vadd.f32 %v1217, %v1223
      %v1238 = vadd.f32 %v1218, %v1223
      %v1239 = vadd.f32 %v1219, %v1223
      %v1240 = vadd.f32 %v1220, %v1223
      %v1241 = vmax.f32 %v1225, 0.0
      %v1242 = vmax.f32 %v1226, 0.0
      %v1243 = vmax.f32 %v1227, 0.0
      %v1244 = vmax.f32 %v1228, 0.0
      %v1245 = vmax.f32 %v1229, 0.0
      %v1246 = vmax.f32 %v1230, 0.0
      %v1247 = vmax.f32 %v1231, 0.0
      %v1248 = vmax.f32 %v1232, 0.0
      %v1249 = vmax.f32 %v1233, 0.0
      %v1250 = vmax.f32 %v1234, 0.0
      %v1251 = vmax.f32 %v1235, 0.0
      %v1252 = vmax.f32 %v1236, 0.0
      %v1253 = vmax.f32 %v1237, 0.0
      %v1254 = vmax.f32 %v1238, 0.0
      %v1255 = vmax.f32 %v1239, 0.0
      %v1256 = vmax.f32 %v1240, 0.0
      %v1257 = vld [vmem:[%s7] sm:$0x1]
      %v1259 = vperm.slane %v1257, 0
      %v1261 = vadd.f32 %v761, %v1259
      %v1262 = vadd.f32 %v763, %v1259
      %v1263 = vadd.f32 %v766, %v1259
      %v1264 = vadd.f32 %v768, %v1259
      %v1265 = vadd.f32 %v771, %v1259
      %v1266 = vadd.f32 %v773, %v1259
      %v1267 = vadd.f32 %v776, %v1259
      %v1268 = vadd.f32 %v778, %v1259
      %v1269 = vadd.f32 %v781, %v1259
      %v1270 = vadd.f32 %v783, %v1259
      %v1271 = vadd.f32 %v786, %v1259
      %v1272 = vadd.f32 %v788, %v1259
      %v1273 = vadd.f32 %v791, %v1259
      %v1274 = vadd.f32 %v793, %v1259
      %v1275 = vadd.f32 %v796, %v1259
      %v1276 = vadd.f32 %v798, %v1259
      %v1277 = vpack.c.bf16 %v1242, %v1241
      %v1278 = vpack.c.bf16 %v1244, %v1243
      %v1279 = vpack.c.bf16 %v1246, %v1245
      %v1280 = vpack.c.bf16 %v1248, %v1247
      %v1281 = vpack.c.bf16 %v1250, %v1249
      %v1282 = vpack.c.bf16 %v1252, %v1251
      %v1283 = vpack.c.bf16 %v1254, %v1253
      %v1284 = vpack.c.bf16 %v1256, %v1255
      %v1285 = vld [vmem:[%s4] sm:$0xf]
      %v1286 = vld [vmem:[%s4 + $0x4] sm:$0xf]
      %v1287 = vld [vmem:[%s4 + $0x8] sm:$0xf]
      %v1288 = vld [vmem:[%s4 + $0xc] sm:$0xf]
      %v1289 = vld [vmem:[%s4 + $0x10] sm:$0xf]
      %v1290 = vld [vmem:[%s4 + $0x14] sm:$0xf]
      %v1291 = vld [vmem:[%s4 + $0x18] sm:$0xf]
      %v1292 = vld [vmem:[%s4 + $0x1c] sm:$0xf]
      %v1293 = vld [vmem:[%s4 + $0x20] sm:$0xf]
      %v1294 = vld [vmem:[%s4 + $0x24] sm:$0xf]
      %v1295 = vld [vmem:[%s4 + $0x28] sm:$0xf]
      %v1296 = vld [vmem:[%s4 + $0x2c] sm:$0xf]
      %v1297 = vld [vmem:[%s4 + $0x30] sm:$0xf]
      %v1298 = vld [vmem:[%s4 + $0x34] sm:$0xf]
      %v1299 = vld [vmem:[%s4 + $0x38] sm:$0xf]
      %v1300 = vld [vmem:[%s4 + $0x3c] sm:$0xf]
      %v1301 = vrot.slane %v1241, 7
      %v1302 = vrot.slane %v1242, 7
      %v1303 = vrot.slane %v1243, 7
      %v1304 = vrot.slane %v1244, 7
      %v1305 = vrot.slane %v1245, 7
      %v1306 = vrot.slane %v1246, 7
      %v1307 = vrot.slane %v1247, 7
      %v1308 = vrot.slane %v1248, 7
      %v1309 = vrot.slane %v1249, 7
      %v1310 = vrot.slane %v1250, 7
      %v1311 = vrot.slane %v1251, 7
      %v1312 = vrot.slane %v1252, 7
      %v1313 = vrot.slane %v1253, 7
      %v1314 = vrot.slane %v1254, 7
      %v1315 = vrot.slane %v1255, 7
      %v1316 = vrot.slane %v1256, 7
      %v1317 = vsel %vm816, %v1315, %v1316
      %v1318 = vsel %vm816, %v1314, %v1315
      %v1319 = vsel %vm816, %v1313, %v1314
      %v1320 = vsel %vm816, %v1312, %v1313
      %v1321 = vsel %vm816, %v1311, %v1312
      %v1322 = vsel %vm816, %v1310, %v1311
      %v1323 = vsel %vm816, %v1309, %v1310
      %v1324 = vsel %vm816, %v1308, %v1309
      %v1325 = vsel %vm816, %v1307, %v1308
      %v1326 = vsel %vm816, %v1306, %v1307
      %v1327 = vsel %vm816, %v1305, %v1306
      %v1328 = vsel %vm816, %v1304, %v1305
      %v1329 = vsel %vm816, %v1303, %v1304
      %v1330 = vsel %vm816, %v1302, %v1303
      %v1331 = vsel %vm816, %v1301, %v1302
      %v1332 = vsel %vm816, %v1316, %v1301
      %v1333 = vsel %vm849, 0.0, %v1332
      %v1334 = vsel %vm850, 0.0, %v1331
      %v1335 = vsel %vm851, 0.0, %v1330
      %v1336 = vsel %vm852, 0.0, %v1329
      %v1337 = vsel %vm853, 0.0, %v1328
      %v1338 = vsel %vm854, 0.0, %v1327
      %v1339 = vsel %vm855, 0.0, %v1326
      %v1340 = vsel %vm856, 0.0, %v1325
      %v1341 = vsel %vm857, 0.0, %v1324
      %v1342 = vsel %vm858, 0.0, %v1323
      %v1343 = vsel %vm859, 0.0, %v1322
      %v1344 = vsel %vm860, 0.0, %v1321
      %v1345 = vsel %vm861, 0.0, %v1320
      %v1346 = vsel %vm862, 0.0, %v1319
      %v1347 = vsel %vm863, 0.0, %v1318
      %v1348 = vsel %vm864, 0.0, %v1317
      %v1349 = vpack.c.bf16 %v1334, %v1333
      %v1350 = vpack.c.bf16 %v1336, %v1335
      %v1351 = vpack.c.bf16 %v1338, %v1337
      %v1352 = vpack.c.bf16 %v1340, %v1339
      %v1353 = vpack.c.bf16 %v1342, %v1341
      %v1354 = vpack.c.bf16 %v1344, %v1343
      %v1355 = vpack.c.bf16 %v1346, %v1345
      %v1356 = vpack.c.bf16 %v1348, %v1347
      %v1357 = vld [vmem:[%s5] sm:$0xf]
      %v1358 = vld [vmem:[%s5 + $0x4] sm:$0xf]
      %v1359 = vld [vmem:[%s5 + $0x8] sm:$0xf]
      %v1360 = vld [vmem:[%s5 + $0xc] sm:$0xf]
      %v1361 = vld [vmem:[%s5 + $0x10] sm:$0xf]
      %v1362 = vld [vmem:[%s5 + $0x14] sm:$0xf]
      %v1363 = vld [vmem:[%s5 + $0x18] sm:$0xf]
      %v1364 = vld [vmem:[%s5 + $0x1c] sm:$0xf]
      %v1365 = vld [vmem:[%s5 + $0x20] sm:$0xf]
      %v1366 = vld [vmem:[%s5 + $0x24] sm:$0xf]
      %v1367 = vld [vmem:[%s5 + $0x28] sm:$0xf]
      %v1368 = vld [vmem:[%s5 + $0x2c] sm:$0xf]
      %v1369 = vld [vmem:[%s5 + $0x30] sm:$0xf]
      %v1370 = vld [vmem:[%s5 + $0x34] sm:$0xf]
      %v1371 = vld [vmem:[%s5 + $0x38] sm:$0xf]
      %v1372 = vld [vmem:[%s5 + $0x3c] sm:$0xf]
      %v1389 = vunpack.c.l.b16 %v1357
      %v1390 = vunpack.c.l.b16 %v1358
      %v1391 = vunpack.c.l.b16 %v1359
      %v1392 = vunpack.c.l.b16 %v1360
      %v1393 = vunpack.c.l.b16 %v1361
      %v1394 = vunpack.c.l.b16 %v1362
      %v1395 = vunpack.c.l.b16 %v1363
      %v1396 = vunpack.c.l.b16 %v1364
      %v1397 = vunpack.c.l.b16 %v1365
      %v1398 = vunpack.c.l.b16 %v1366
      %v1399 = vunpack.c.l.b16 %v1367
      %v1400 = vunpack.c.l.b16 %v1368
      %v1401 = vunpack.c.l.b16 %v1369
      %v1402 = vunpack.c.l.b16 %v1370
      %v1403 = vunpack.c.l.b16 %v1371
      %v1404 = vunpack.c.l.b16 %v1372
      %v1405 = vpack.c.b16 %v1390, %v1389
      %v1406 = vpack.c.b16 %v1392, %v1391
      %v1407 = vpack.c.b16 %v1394, %v1393
      %v1408 = vpack.c.b16 %v1396, %v1395
      %v1409 = vpack.c.b16 %v1398, %v1397
      %v1410 = vpack.c.b16 %v1400, %v1399
      %v1411 = vpack.c.b16 %v1402, %v1401
      %v1412 = vpack.c.b16 %v1404, %v1403
      %1421 = vmatpush.bf16.msra.mxu0 %v1412
      %1422 = vmatpush.bf16.msra.mxu0 %v1411
      %1423 = vmatpush.bf16.msra.mxu0 %v1410
      %1424 = vmatpush.bf16.msra.mxu0 %v1409
      %1425 = vmatpush.bf16.msra.mxu0 %v1408
      %1426 = vmatpush.bf16.msra.mxu0 %v1407
      %1427 = vmatpush.bf16.msra.mxu0 %v1406
      %1428 = vmatpush.bf16.msra.mxu0 %v1405
      %1429 = vmatmul.bf16.gmra.mxu0 %v1349
      %v1430 = vpop.f32.mrf.mxu0
      %v1431 = vadd.f32 0.0, %v1430
      %v1432 = vpop.f32.mrf.mxu0
      %v1433 = vadd.f32 0.0, %v1432
      %1434 = vmatmul.bf16.gmra.mxu0 %v1350
      %v1435 = vpop.f32.mrf.mxu0
      %v1436 = vadd.f32 0.0, %v1435
      %v1437 = vpop.f32.mrf.mxu0
      %v1438 = vadd.f32 0.0, %v1437
      %1439 = vmatmul.bf16.gmra.mxu0 %v1351
      %v1440 = vpop.f32.mrf.mxu0
      %v1441 = vadd.f32 0.0, %v1440
      %v1442 = vpop.f32.mrf.mxu0
      %v1443 = vadd.f32 0.0, %v1442
      %1444 = vmatmul.bf16.gmra.mxu0 %v1352
      %v1445 = vpop.f32.mrf.mxu0
      %v1446 = vadd.f32 0.0, %v1445
      %v1447 = vpop.f32.mrf.mxu0
      %v1448 = vadd.f32 0.0, %v1447
      %1449 = vmatmul.bf16.gmra.mxu0 %v1353
      %v1450 = vpop.f32.mrf.mxu0
      %v1451 = vadd.f32 0.0, %v1450
      %v1452 = vpop.f32.mrf.mxu0
      %v1453 = vadd.f32 0.0, %v1452
      %1454 = vmatmul.bf16.gmra.mxu0 %v1354
      %v1455 = vpop.f32.mrf.mxu0
      %v1456 = vadd.f32 0.0, %v1455
      %v1457 = vpop.f32.mrf.mxu0
      %v1458 = vadd.f32 0.0, %v1457
      %1459 = vmatmul.bf16.gmra.mxu0 %v1355
      %v1460 = vpop.f32.mrf.mxu0
      %v1461 = vadd.f32 0.0, %v1460
      %v1462 = vpop.f32.mrf.mxu0
      %v1463 = vadd.f32 0.0, %v1462
      %1464 = vmatmul.bf16.gmra.mxu0 %v1356
      %v1465 = vpop.f32.mrf.mxu0
      %v1466 = vadd.f32 0.0, %v1465
      %v1467 = vpop.f32.mrf.mxu0
      %v1468 = vadd.f32 0.0, %v1467
      %1469 = vdwg.mxu0
      %v1470 = vrot.slane %v1241, 1
      %v1471 = vrot.slane %v1242, 1
      %v1472 = vrot.slane %v1243, 1
      %v1473 = vrot.slane %v1244, 1
      %v1474 = vrot.slane %v1245, 1
      %v1475 = vrot.slane %v1246, 1
      %v1476 = vrot.slane %v1247, 1
      %v1477 = vrot.slane %v1248, 1
      %v1478 = vrot.slane %v1249, 1
      %v1479 = vrot.slane %v1250, 1
      %v1480 = vrot.slane %v1251, 1
      %v1481 = vrot.slane %v1252, 1
      %v1482 = vrot.slane %v1253, 1
      %v1483 = vrot.slane %v1254, 1
      %v1484 = vrot.slane %v1255, 1
      %v1485 = vrot.slane %v1256, 1
      %v1486 = vsel %vm1010, %v1484, %v1485
      %v1487 = vsel %vm1010, %v1483, %v1484
      %v1488 = vsel %vm1010, %v1482, %v1483
      %v1489 = vsel %vm1010, %v1481, %v1482
      %v1490 = vsel %vm1010, %v1480, %v1481
      %v1491 = vsel %vm1010, %v1479, %v1480
      %v1492 = vsel %vm1010, %v1478, %v1479
      %v1493 = vsel %vm1010, %v1477, %v1478
      %v1494 = vsel %vm1010, %v1476, %v1477
      %v1495 = vsel %vm1010, %v1475, %v1476
      %v1496 = vsel %vm1010, %v1474, %v1475
      %v1497 = vsel %vm1010, %v1473, %v1474
      %v1498 = vsel %vm1010, %v1472, %v1473
      %v1499 = vsel %vm1010, %v1471, %v1472
      %v1500 = vsel %vm1010, %v1470, %v1471
      %v1501 = vsel %vm1010, %v1485, %v1470
      %v1502 = vsel %vm1043, 0.0, %v1500
      %v1503 = vsel %vm1044, 0.0, %v1499
      %v1504 = vsel %vm1045, 0.0, %v1498
      %v1505 = vsel %vm1046, 0.0, %v1497
      %v1506 = vsel %vm1047, 0.0, %v1496
      %v1507 = vsel %vm1048, 0.0, %v1495
      %v1508 = vsel %vm1049, 0.0, %v1494
      %v1509 = vsel %vm1050, 0.0, %v1493
      %v1510 = vsel %vm1051, 0.0, %v1492
      %v1511 = vsel %vm1052, 0.0, %v1491
      %v1512 = vsel %vm1053, 0.0, %v1490
      %v1513 = vsel %vm1054, 0.0, %v1489
      %v1514 = vsel %vm1055, 0.0, %v1488
      %v1515 = vsel %vm1056, 0.0, %v1487
      %v1516 = vsel %vm1057, 0.0, %v1486
      %v1517 = vsel %vm1058, 0.0, %v1501
      %v1518 = vpack.c.bf16 %v1503, %v1502
      %v1519 = vpack.c.bf16 %v1505, %v1504
      %v1520 = vpack.c.bf16 %v1507, %v1506
      %v1521 = vpack.c.bf16 %v1509, %v1508
      %v1522 = vpack.c.bf16 %v1511, %v1510
      %v1523 = vpack.c.bf16 %v1513, %v1512
      %v1524 = vpack.c.bf16 %v1515, %v1514
      %v1525 = vpack.c.bf16 %v1517, %v1516
      %s1526 = scalar_lea.vmem %s5, 64
      %v1527 = vld [vmem:[%s1526] sm:$0xf]
      %v1528 = vld [vmem:[%s1526 + $0x4] sm:$0xf]
      %v1529 = vld [vmem:[%s1526 + $0x8] sm:$0xf]
      %v1530 = vld [vmem:[%s1526 + $0xc] sm:$0xf]
      %v1531 = vld [vmem:[%s1526 + $0x10] sm:$0xf]
      %v1532 = vld [vmem:[%s1526 + $0x14] sm:$0xf]
      %v1533 = vld [vmem:[%s1526 + $0x18] sm:$0xf]
      %v1534 = vld [vmem:[%s1526 + $0x1c] sm:$0xf]
      %v1535 = vld [vmem:[%s1526 + $0x20] sm:$0xf]
      %v1536 = vld [vmem:[%s1526 + $0x24] sm:$0xf]
      %v1537 = vld [vmem:[%s1526 + $0x28] sm:$0xf]
      %v1538 = vld [vmem:[%s1526 + $0x2c] sm:$0xf]
      %v1539 = vld [vmem:[%s1526 + $0x30] sm:$0xf]
      %v1540 = vld [vmem:[%s1526 + $0x34] sm:$0xf]
      %v1541 = vld [vmem:[%s1526 + $0x38] sm:$0xf]
      %v1542 = vld [vmem:[%s1526 + $0x3c] sm:$0xf]
      %v1559 = vunpack.c.l.b16 %v1527
      %v1560 = vunpack.c.l.b16 %v1528
      %v1561 = vunpack.c.l.b16 %v1529
      %v1562 = vunpack.c.l.b16 %v1530
      %v1563 = vunpack.c.l.b16 %v1531
      %v1564 = vunpack.c.l.b16 %v1532
      %v1565 = vunpack.c.l.b16 %v1533
      %v1566 = vunpack.c.l.b16 %v1534
      %v1567 = vunpack.c.l.b16 %v1535
      %v1568 = vunpack.c.l.b16 %v1536
      %v1569 = vunpack.c.l.b16 %v1537
      %v1570 = vunpack.c.l.b16 %v1538
      %v1571 = vunpack.c.l.b16 %v1539
      %v1572 = vunpack.c.l.b16 %v1540
      %v1573 = vunpack.c.l.b16 %v1541
      %v1574 = vunpack.c.l.b16 %v1542
      %v1575 = vpack.c.b16 %v1560, %v1559
      %v1576 = vpack.c.b16 %v1562, %v1561
      %v1577 = vpack.c.b16 %v1564, %v1563
      %v1578 = vpack.c.b16 %v1566, %v1565
      %v1579 = vpack.c.b16 %v1568, %v1567
      %v1580 = vpack.c.b16 %v1570, %v1569
      %v1581 = vpack.c.b16 %v1572, %v1571
      %v1582 = vpack.c.b16 %v1574, %v1573
      %1591 = vmatpush.bf16.msra.mxu0 %v1582
      %1592 = vmatpush.bf16.msra.mxu0 %v1581
      %1593 = vmatpush.bf16.msra.mxu0 %v1580
      %1594 = vmatpush.bf16.msra.mxu0 %v1579
      %1595 = vmatpush.bf16.msra.mxu0 %v1578
      %1596 = vmatpush.bf16.msra.mxu0 %v1577
      %1597 = vmatpush.bf16.msra.mxu0 %v1576
      %1598 = vmatpush.bf16.msra.mxu0 %v1575
      %1599 = vmatmul.bf16.gmra.mxu0 %v1518
      %v1600 = vpop.f32.mrf.mxu0
      %v1601 = vadd.f32 0.0, %v1600
      %v1602 = vpop.f32.mrf.mxu0
      %v1603 = vadd.f32 0.0, %v1602
      %1604 = vmatmul.bf16.gmra.mxu0 %v1519
      %v1605 = vpop.f32.mrf.mxu0
      %v1606 = vadd.f32 0.0, %v1605
      %v1607 = vpop.f32.mrf.mxu0
      %v1608 = vadd.f32 0.0, %v1607
      %1609 = vmatmul.bf16.gmra.mxu0 %v1520
      %v1610 = vpop.f32.mrf.mxu0
      %v1611 = vadd.f32 0.0, %v1610
      %v1612 = vpop.f32.mrf.mxu0
      %v1613 = vadd.f32 0.0, %v1612
      %1614 = vmatmul.bf16.gmra.mxu0 %v1521
      %v1615 = vpop.f32.mrf.mxu0
      %v1616 = vadd.f32 0.0, %v1615
      %v1617 = vpop.f32.mrf.mxu0
      %v1618 = vadd.f32 0.0, %v1617
      %1619 = vmatmul.bf16.gmra.mxu0 %v1522
      %v1620 = vpop.f32.mrf.mxu0
      %v1621 = vadd.f32 0.0, %v1620
      %v1622 = vpop.f32.mrf.mxu0
      %v1623 = vadd.f32 0.0, %v1622
      %1624 = vmatmul.bf16.gmra.mxu0 %v1523
      %v1625 = vpop.f32.mrf.mxu0
      %v1626 = vadd.f32 0.0, %v1625
      %v1627 = vpop.f32.mrf.mxu0
      %v1628 = vadd.f32 0.0, %v1627
      %1629 = vmatmul.bf16.gmra.mxu0 %v1524
      %v1630 = vpop.f32.mrf.mxu0
      %v1631 = vadd.f32 0.0, %v1630
      %v1632 = vpop.f32.mrf.mxu0
      %v1633 = vadd.f32 0.0, %v1632
      %1634 = vmatmul.bf16.gmra.mxu0 %v1525
      %v1635 = vpop.f32.mrf.mxu0
      %v1636 = vadd.f32 0.0, %v1635
      %v1637 = vpop.f32.mrf.mxu0
      %v1638 = vadd.f32 0.0, %v1637
      %1639 = vdwg.mxu0
      %v1656 = vunpack.c.l.b16 %v1285
      %v1657 = vunpack.c.l.b16 %v1286
      %v1658 = vunpack.c.l.b16 %v1287
      %v1659 = vunpack.c.l.b16 %v1288
      %v1660 = vunpack.c.l.b16 %v1289
      %v1661 = vunpack.c.l.b16 %v1290
      %v1662 = vunpack.c.l.b16 %v1291
      %v1663 = vunpack.c.l.b16 %v1292
      %v1664 = vunpack.c.l.b16 %v1293
      %v1665 = vunpack.c.l.b16 %v1294
      %v1666 = vunpack.c.l.b16 %v1295
      %v1667 = vunpack.c.l.b16 %v1296
      %v1668 = vunpack.c.l.b16 %v1297
      %v1669 = vunpack.c.l.b16 %v1298
      %v1670 = vunpack.c.l.b16 %v1299
      %v1671 = vunpack.c.l.b16 %v1300
      %v1672 = vpack.c.b16 %v1657, %v1656
      %v1673 = vpack.c.b16 %v1659, %v1658
      %v1674 = vpack.c.b16 %v1661, %v1660
      %v1675 = vpack.c.b16 %v1663, %v1662
      %v1676 = vpack.c.b16 %v1665, %v1664
      %v1677 = vpack.c.b16 %v1667, %v1666
      %v1678 = vpack.c.b16 %v1669, %v1668
      %v1679 = vpack.c.b16 %v1671, %v1670
      %1688 = vmatpush.bf16.msra.mxu0 %v1679
      %1689 = vmatpush.bf16.msra.mxu0 %v1678
      %1690 = vmatpush.bf16.msra.mxu0 %v1677
      %1691 = vmatpush.bf16.msra.mxu0 %v1676
      %1692 = vmatpush.bf16.msra.mxu0 %v1675
      %1693 = vmatpush.bf16.msra.mxu0 %v1674
      %1694 = vmatpush.bf16.msra.mxu0 %v1673
      %1695 = vmatpush.bf16.msra.mxu0 %v1672
      %1696 = vmatmul.bf16.gmra.mxu0 %v1277
      %v1697 = vpop.f32.mrf.mxu0
      %v1698 = vadd.f32 %v1431, %v1697
      %v1699 = vpop.f32.mrf.mxu0
      %v1700 = vadd.f32 %v1433, %v1699
      %1701 = vmatmul.bf16.gmra.mxu0 %v1278
      %v1702 = vpop.f32.mrf.mxu0
      %v1703 = vadd.f32 %v1436, %v1702
      %v1704 = vpop.f32.mrf.mxu0
      %v1705 = vadd.f32 %v1438, %v1704
      %1706 = vmatmul.bf16.gmra.mxu0 %v1279
      %v1707 = vpop.f32.mrf.mxu0
      %v1708 = vadd.f32 %v1441, %v1707
      %v1709 = vpop.f32.mrf.mxu0
      %v1710 = vadd.f32 %v1443, %v1709
      %1711 = vmatmul.bf16.gmra.mxu0 %v1280
      %v1712 = vpop.f32.mrf.mxu0
      %v1713 = vadd.f32 %v1446, %v1712
      %v1714 = vpop.f32.mrf.mxu0
      %v1715 = vadd.f32 %v1448, %v1714
      %1716 = vmatmul.bf16.gmra.mxu0 %v1281
      %v1717 = vpop.f32.mrf.mxu0
      %v1718 = vadd.f32 %v1451, %v1717
      %v1719 = vpop.f32.mrf.mxu0
      %v1720 = vadd.f32 %v1453, %v1719
      %1721 = vmatmul.bf16.gmra.mxu0 %v1282
      %v1722 = vpop.f32.mrf.mxu0
      %v1723 = vadd.f32 %v1456, %v1722
      %v1724 = vpop.f32.mrf.mxu0
      %v1725 = vadd.f32 %v1458, %v1724
      %1726 = vmatmul.bf16.gmra.mxu0 %v1283
      %v1727 = vpop.f32.mrf.mxu0
      %v1728 = vadd.f32 %v1461, %v1727
      %v1729 = vpop.f32.mrf.mxu0
      %v1730 = vadd.f32 %v1463, %v1729
      %1731 = vmatmul.bf16.gmra.mxu0 %v1284
      %v1732 = vpop.f32.mrf.mxu0
      %v1733 = vadd.f32 %v1466, %v1732
      %v1734 = vpop.f32.mrf.mxu0
      %v1735 = vadd.f32 %v1468, %v1734
      %1736 = vdwg.mxu0
      %v1737 = vadd.f32 %v1698, %v1601
      %v1738 = vadd.f32 %v1700, %v1603
      %v1739 = vadd.f32 %v1703, %v1606
      %v1740 = vadd.f32 %v1705, %v1608
      %v1741 = vadd.f32 %v1708, %v1611
      %v1742 = vadd.f32 %v1710, %v1613
      %v1743 = vadd.f32 %v1713, %v1616
      %v1744 = vadd.f32 %v1715, %v1618
      %v1745 = vadd.f32 %v1718, %v1621
      %v1746 = vadd.f32 %v1720, %v1623
      %v1747 = vadd.f32 %v1723, %v1626
      %v1748 = vadd.f32 %v1725, %v1628
      %v1749 = vadd.f32 %v1728, %v1631
      %v1750 = vadd.f32 %v1730, %v1633
      %v1751 = vadd.f32 %v1733, %v1636
      %v1752 = vadd.f32 %v1735, %v1638
      %v1753 = vld [vmem:[%s6] sm:$0x1]
      %v1755 = vperm.slane %v1753, 0
      %v1757 = vadd.f32 %v1737, %v1755
      %v1758 = vadd.f32 %v1738, %v1755
      %v1759 = vadd.f32 %v1739, %v1755
      %v1760 = vadd.f32 %v1740, %v1755
      %v1761 = vadd.f32 %v1741, %v1755
      %v1762 = vadd.f32 %v1742, %v1755
      %v1763 = vadd.f32 %v1743, %v1755
      %v1764 = vadd.f32 %v1744, %v1755
      %v1765 = vadd.f32 %v1745, %v1755
      %v1766 = vadd.f32 %v1746, %v1755
      %v1767 = vadd.f32 %v1747, %v1755
      %v1768 = vadd.f32 %v1748, %v1755
      %v1769 = vadd.f32 %v1749, %v1755
      %v1770 = vadd.f32 %v1750, %v1755
      %v1771 = vadd.f32 %v1751, %v1755
      %v1772 = vadd.f32 %v1752, %v1755
      %v1773 = vadd.f32 %v1261, %v1757
      %v1774 = vadd.f32 %v1262, %v1758
      %v1775 = vadd.f32 %v1263, %v1759
      %v1776 = vadd.f32 %v1264, %v1760
      %v1777 = vadd.f32 %v1265, %v1761
      %v1778 = vadd.f32 %v1266, %v1762
      %v1779 = vadd.f32 %v1267, %v1763
      %v1780 = vadd.f32 %v1268, %v1764
      %v1781 = vadd.f32 %v1269, %v1765
      %v1782 = vadd.f32 %v1270, %v1766
      %v1783 = vadd.f32 %v1271, %v1767
      %v1784 = vadd.f32 %v1272, %v1768
      %v1785 = vadd.f32 %v1273, %v1769
      %v1786 = vadd.f32 %v1274, %v1770
      %v1787 = vadd.f32 %v1275, %v1771
      %v1788 = vadd.f32 %v1276, %v1772
      %v1789 = vmax.f32 %v1773, 0.0
      %v1790 = vmax.f32 %v1774, 0.0
      %v1791 = vmax.f32 %v1775, 0.0
      %v1792 = vmax.f32 %v1776, 0.0
      %v1793 = vmax.f32 %v1777, 0.0
      %v1794 = vmax.f32 %v1778, 0.0
      %v1795 = vmax.f32 %v1779, 0.0
      %v1796 = vmax.f32 %v1780, 0.0
      %v1797 = vmax.f32 %v1781, 0.0
      %v1798 = vmax.f32 %v1782, 0.0
      %v1799 = vmax.f32 %v1783, 0.0
      %v1800 = vmax.f32 %v1784, 0.0
      %v1801 = vmax.f32 %v1785, 0.0
      %v1802 = vmax.f32 %v1786, 0.0
      %v1803 = vmax.f32 %v1787, 0.0
      %v1804 = vmax.f32 %v1788, 0.0
      %v1805 = vrot.slane %v1789, 1
      %v1806 = vrot.slane %v1790, 1
      %v1807 = vrot.slane %v1791, 1
      %v1808 = vrot.slane %v1792, 1
      %v1809 = vrot.slane %v1793, 1
      %v1810 = vrot.slane %v1794, 1
      %v1811 = vrot.slane %v1795, 1
      %v1812 = vrot.slane %v1796, 1
      %v1813 = vrot.slane %v1797, 1
      %v1814 = vrot.slane %v1798, 1
      %v1815 = vrot.slane %v1799, 1
      %v1816 = vrot.slane %v1800, 1
      %v1817 = vrot.slane %v1801, 1
      %v1818 = vrot.slane %v1802, 1
      %v1819 = vrot.slane %v1803, 1
      %v1820 = vrot.slane %v1804, 1
      %v1821 = vsel %vm1010, %v1819, %v1820
      %v1822 = vsel %vm1010, %v1818, %v1819
      %v1823 = vsel %vm1010, %v1817, %v1818
      %v1824 = vsel %vm1010, %v1816, %v1817
      %v1825 = vsel %vm1010, %v1815, %v1816
      %v1826 = vsel %vm1010, %v1814, %v1815
      %v1827 = vsel %vm1010, %v1813, %v1814
      %v1828 = vsel %vm1010, %v1812, %v1813
      %v1829 = vsel %vm1010, %v1811, %v1812
      %v1830 = vsel %vm1010, %v1810, %v1811
      %v1831 = vsel %vm1010, %v1809, %v1810
      %v1832 = vsel %vm1010, %v1808, %v1809
      %v1833 = vsel %vm1010, %v1807, %v1808
      %v1834 = vsel %vm1010, %v1806, %v1807
      %v1835 = vsel %vm1010, %v1805, %v1806
      %v1836 = vsel %vm1010, %v1820, %v1805
      %v1837 = vmax.f32 %v1789, %v1835
      %v1838 = vmax.f32 %v1790, %v1834
      %v1839 = vmax.f32 %v1791, %v1833
      %v1840 = vmax.f32 %v1792, %v1832
      %v1841 = vmax.f32 %v1793, %v1831
      %v1842 = vmax.f32 %v1794, %v1830
      %v1843 = vmax.f32 %v1795, %v1829
      %v1844 = vmax.f32 %v1796, %v1828
      %v1845 = vmax.f32 %v1797, %v1827
      %v1846 = vmax.f32 %v1798, %v1826
      %v1847 = vmax.f32 %v1799, %v1825
      %v1848 = vmax.f32 %v1800, %v1824
      %v1849 = vmax.f32 %v1801, %v1823
      %v1850 = vmax.f32 %v1802, %v1822
      %v1851 = vmax.f32 %v1803, %v1821
      %v1852 = vmax.f32 %v1804, %v1836
      %v1853 = vld [vmem:[%s8] sm:$0xff]
      %v1854 = vld [vmem:[%s8 + $0x8] sm:$0xff]
      %v1855 = vld [vmem:[%s8 + $0x10] sm:$0xff]
      %v1856 = vld [vmem:[%s8 + $0x18] sm:$0xff]
      %v1857 = vld [vmem:[%s8 + $0x20] sm:$0xff]
      %v1858 = vld [vmem:[%s8 + $0x28] sm:$0xff]
      %v1859 = vld [vmem:[%s8 + $0x30] sm:$0xff]
      %v1860 = vld [vmem:[%s8 + $0x38] sm:$0xff]
      %1861 = vmatpush.msra.mxu0 %v1852
      %1862 = vmatpush.msra.mxu0 %v1851
      %1863 = vmatpush.msra.mxu0 %v1850
      %1864 = vmatpush.msra.mxu0 %v1849
      %1865 = vmatpush.msra.mxu0 %v1848
      %1866 = vmatpush.msra.mxu0 %v1847
      %1867 = vmatpush.msra.mxu0 %v1846
      %1868 = vmatpush.msra.mxu0 %v1845
      %1869 = vmatpush.msra.mxu0 %v1844
      %1870 = vmatpush.msra.mxu0 %v1843
      %1871 = vmatpush.msra.mxu0 %v1842
      %1872 = vmatpush.msra.mxu0 %v1841
      %1873 = vmatpush.msra.mxu0 %v1840
      %1874 = vmatpush.msra.mxu0 %v1839
      %1875 = vmatpush.msra.mxu0 %v1838
      %1876 = vmatpush.msra.mxu0 %v1837
      %1877 = vmatmul.f32.gmra.mxu0 %v1853
      %v1878 = vpop.f32.mrf.mxu0
      %v1879 = vadd.f32 0.0, %v1878
      %1880 = vmatmul.f32.gmra.mxu0 %v1854
      %v1881 = vpop.f32.mrf.mxu0
      %v1882 = vadd.f32 0.0, %v1881
      %1883 = vmatmul.f32.gmra.mxu0 %v1855
      %v1884 = vpop.f32.mrf.mxu0
      %v1885 = vadd.f32 0.0, %v1884
      %1886 = vmatmul.f32.gmra.mxu0 %v1856
      %v1887 = vpop.f32.mrf.mxu0
      %v1888 = vadd.f32 0.0, %v1887
      %1889 = vmatmul.f32.gmra.mxu0 %v1857
      %v1890 = vpop.f32.mrf.mxu0
      %v1891 = vadd.f32 0.0, %v1890
      %1892 = vmatmul.f32.gmra.mxu0 %v1858
      %v1893 = vpop.f32.mrf.mxu0
      %v1894 = vadd.f32 0.0, %v1893
      %1895 = vmatmul.f32.gmra.mxu0 %v1859
      %v1896 = vpop.f32.mrf.mxu0
      %v1897 = vadd.f32 0.0, %v1896
      %1898 = vmatmul.f32.gmra.mxu0 %v1860
      %v1899 = vpop.f32.mrf.mxu0
      %v1900 = vadd.f32 0.0, %v1899
      %1901 = vdwg.mxu0
      %v1902 = vld [vmem:[%s9] sm:$0xff]
      %v1903 = vld [vmem:[%s9 + $0x8] sm:$0xff]
      %v1904 = vld [vmem:[%s9 + $0x10] sm:$0xff]
      %v1905 = vld [vmem:[%s9 + $0x18] sm:$0xff]
      %v1906 = vld [vmem:[%s9 + $0x20] sm:$0xff]
      %v1907 = vld [vmem:[%s9 + $0x28] sm:$0xff]
      %v1908 = vld [vmem:[%s9 + $0x30] sm:$0xff]
      %v1909 = vld [vmem:[%s9 + $0x38] sm:$0xff]
      %v1910 = vld [vmem:[%s9 + $0x40] sm:$0xff]
      %v1911 = vld [vmem:[%s9 + $0x48] sm:$0xff]
      %v1912 = vld [vmem:[%s9 + $0x50] sm:$0xff]
      %v1913 = vld [vmem:[%s9 + $0x58] sm:$0xff]
      %v1914 = vld [vmem:[%s9 + $0x60] sm:$0xff]
      %v1915 = vld [vmem:[%s9 + $0x68] sm:$0xff]
      %v1916 = vld [vmem:[%s9 + $0x70] sm:$0xff]
      %v1917 = vld [vmem:[%s9 + $0x78] sm:$0xff]
      %1918 = vmatpush.msra.mxu0 %v1917
      %1919 = vmatpush.msra.mxu0 %v1916
      %1920 = vmatpush.msra.mxu0 %v1915
      %1921 = vmatpush.msra.mxu0 %v1914
      %1922 = vmatpush.msra.mxu0 %v1913
      %1923 = vmatpush.msra.mxu0 %v1912
      %1924 = vmatpush.msra.mxu0 %v1911
      %1925 = vmatpush.msra.mxu0 %v1910
      %1926 = vmatpush.msra.mxu0 %v1909
      %1927 = vmatpush.msra.mxu0 %v1908
      %1928 = vmatpush.msra.mxu0 %v1907
      %1929 = vmatpush.msra.mxu0 %v1906
      %1930 = vmatpush.msra.mxu0 %v1905
      %1931 = vmatpush.msra.mxu0 %v1904
      %1932 = vmatpush.msra.mxu0 %v1903
      %1933 = vmatpush.msra.mxu0 %v1902
      %1934 = vmatmul.f32.gmra.mxu0 %v1879
      %v1935 = vpop.f32.mrf.mxu0
      %v1936 = vadd.f32 0.0, %v1935
      %1937 = vmatmul.f32.gmra.mxu0 %v1882
      %v1938 = vpop.f32.mrf.mxu0
      %v1939 = vadd.f32 0.0, %v1938
      %1940 = vmatmul.f32.gmra.mxu0 %v1885
      %v1941 = vpop.f32.mrf.mxu0
      %v1942 = vadd.f32 0.0, %v1941
      %1943 = vmatmul.f32.gmra.mxu0 %v1888
      %v1944 = vpop.f32.mrf.mxu0
      %v1945 = vadd.f32 0.0, %v1944
      %1946 = vmatmul.f32.gmra.mxu0 %v1891
      %v1947 = vpop.f32.mrf.mxu0
      %v1948 = vadd.f32 0.0, %v1947
      %1949 = vmatmul.f32.gmra.mxu0 %v1894
      %v1950 = vpop.f32.mrf.mxu0
      %v1951 = vadd.f32 0.0, %v1950
      %1952 = vmatmul.f32.gmra.mxu0 %v1897
      %v1953 = vpop.f32.mrf.mxu0
      %v1954 = vadd.f32 0.0, %v1953
      %1955 = vmatmul.f32.gmra.mxu0 %v1900
      %v1956 = vpop.f32.mrf.mxu0
      %v1957 = vadd.f32 0.0, %v1956
      %1958 = vdwg.mxu0
      %1959 = vrot.lane.b32.xlu0 %v1936, 64
      %v1960 = vpop.permute.xlu0 %1959
      %1961 = vrot.lane.b32.xlu0 %v1939, 64
      %v1962 = vpop.permute.xlu0 %1961
      %1963 = vrot.lane.b32.xlu0 %v1942, 64
      %v1964 = vpop.permute.xlu0 %1963
      %1965 = vrot.lane.b32.xlu0 %v1945, 64
      %v1966 = vpop.permute.xlu0 %1965
      %1967 = vrot.lane.b32.xlu0 %v1948, 64
      %v1968 = vpop.permute.xlu0 %1967
      %1969 = vrot.lane.b32.xlu0 %v1951, 64
      %v1970 = vpop.permute.xlu0 %1969
      %1971 = vrot.lane.b32.xlu0 %v1954, 64
      %v1972 = vpop.permute.xlu0 %1971
      %1973 = vrot.lane.b32.xlu0 %v1957, 64
      %v1974 = vpop.permute.xlu0 %1973
      %v1975 = vmax.f32 %v1936, %v1960
      %v1976 = vmax.f32 %v1939, %v1962
      %v1977 = vmax.f32 %v1942, %v1964
      %v1978 = vmax.f32 %v1945, %v1966
      %v1979 = vmax.f32 %v1948, %v1968
      %v1980 = vmax.f32 %v1951, %v1970
      %v1981 = vmax.f32 %v1954, %v1972
      %v1982 = vmax.f32 %v1957, %v1974
      %v1983 = vlaneseq
      %v1984 = vand.u32 %v1983, 127
      %vm1985 = vcmp.lt.s32.totalorder %v1984, 64
      %v1986 = vsel %vm1985, %v1975, %v1979
      %v1987 = vsel %vm1985, %v1976, %v1980
      %v1988 = vsel %vm1985, %v1977, %v1981
      %v1989 = vsel %vm1985, %v1978, %v1982
      %1990 = vst [vmem:[%s361] sm:$0xff] %v1986
      %1991 = vst [vmem:[%s361 + $0x8] sm:$0xff] %v1987
      %1992 = vst [vmem:[%s361 + $0x10] sm:$0xff] %v1988
      %1993 = vst [vmem:[%s361 + $0x18] sm:$0xff] %v1989
      %s1994 = smul.u32 4, %s21
      %p1995 = scmp.lt.s32.totalorder %s1994, 7
      %s1996 = scalar_select %p1995, %s1994, 7
      %s1997 = smul.addr %s1996, 8
      %s1998 = scalar_lea.vmem %s10, %s1997
      // Predicated region
      $region61: #{block_forward_pallas.1} parent=59 // pred_check
        %p1999 = pneg %p254
      $region62: #{block_forward_pallas.1} parent=59 // pred_check_branch
        %2001 = sbr.rel (%p1999) target = $region64
      $region63: #{block_forward_pallas.1} parent=59 // pred_region
        %s2002 = smul.u32 4, %s21
      $region64: #{block_forward_pallas.1} parent=59 // pred_fallthru
        _
    $region60: #{block_forward_pallas.1} parent=5 // pred_fallthru
      _
    %p2003 = scmp.le.s32.totalorder 2, %s16
    // Predicated region
    $region65: #{block_forward_pallas.1} parent=5 // pred_check
      %p2004 = pneg %p2003
    $region66: #{block_forward_pallas.1} parent=5 // pred_check_branch
      %2006 = sbr.rel (%p2004) target = $region68
    $region67: #{block_forward_pallas.1} parent=5 // pred_region
      %s2007 = ssub.s32 %s16, 2
      // Predicated region
      $region69: #{block_forward_pallas.1} parent=67 // pred_check
        %p2008 = pneg %p260
      $region70: #{block_forward_pallas.1} parent=67 // pred_check_branch
        %2010 = sbr.rel (%p2008) target = $region72
      $region71: #{block_forward_pallas.1} parent=67 // pred_region
        %s2011 = smul.u32 4, %s22
        %p2012 = scmp.lt.s32.totalorder %s2011, 7
        %s2013 = scalar_select %p2012, %s2011, 7
        %s2014 = smul.addr %s2013, 8
        %s2015 = scalar_lea.vmem %s10, %s2014
      $region72: #{block_forward_pallas.1} parent=67 // pred_fallthru
        _
    $region68: #{block_forward_pallas.1} parent=5 // pred_fallthru
      _
  $region6: #{block_forward_pallas.1} parent=0 // loop_footer
    %s20 = sadd.s32 1, %s16
  $region7: #{block_forward_pallas.1} parent=0 // loop_footer_branch
    %15 = sbr.rel target = $region3
  $region8: #{block_forward_pallas.1} parent=0 // loop_exit
    _

</llo_original>
